<compile_context>
chip_gen: v7x
topology: tpu7x:2x2x1
jax: 0.10.0
libtpu: 0.0.40
codegen_flags: <defaults>
</compile_context>

<pallas_src>
import math
from functools import partial

import jax
import jax.numpy as jnp
from jax.experimental import pallas as pl
from jax.experimental.pallas import tpu as pltpu


# --------------------------------------------------------------------------- tiling helpers
def _round_up(x, m):
    return (x + m - 1) // m * m


def _pick_tile(n, cap, mults=(256, 128, 8)):
    """Largest divisor of n that is <= cap, preferring coarse (MXU-friendly) granularity.
    Falls back to the full dimension when no aligned divisor exists."""
    if n <= cap:
        return n
    for m in mults:
        d = (cap // m) * m
        while d >= m:
            if n % d == 0:
                return d
            d -= m
    return n


# ------------------------------------------------------------------ kernel 1: fused QKV projection
def _qkv_proj_kernel(x_ref, w_ref, b_ref, o_ref, acc_ref):
    # x_ref: (tm, tkk) f32   w_ref: (tkk, tn) bf16   b_ref: (1, tn) f32
    # o_ref: (tm, tn) bf16   acc_ref: (tm, tn) f32
    kk = pl.program_id(2)

    @pl.when(kk == 0)
    def _():
        acc_ref[...] = jnp.zeros_like(acc_ref)

    # bf16 x bf16 MXU matmul, f32 accumulation.
    acc_ref[...] += jnp.dot(x_ref[...].astype(jnp.bfloat16), w_ref[...],
                            preferred_element_type=jnp.float32)

    @pl.when(kk == pl.num_programs(2) - 1)
    def _():
        o_ref[...] = (acc_ref[...] + b_ref[...]).astype(o_ref.dtype)


def _proj_vmem_bytes(tm, tkk, tn):
    lane = 128
    xb = _round_up(tm, 8) * _round_up(tkk, lane) * 4      # f32 x block
    wb = _round_up(tkk, 8) * _round_up(tn, lane) * 2      # bf16 weight block
    bb = 8 * _round_up(tn, lane) * 4                      # bias block (padded)
    ob = _round_up(tm, 8) * _round_up(tn, lane) * 2       # bf16 output block
    acc = _round_up(tm, 8) * _round_up(tn, lane) * 4      # f32 accumulator scratch
    return 2 * (xb + wb + bb + ob) + acc                  # double-buffered pipeline blocks


def _qkv_projection(x2, wqkv, bqkv):
    rows, H = x2.shape
    N = wqkv.shape[1]  # 3 * H

    tm = _pick_tile(rows, 512)
    tn = _pick_tile(N, 768)
    tkk = _pick_tile(H, 1024)

    budget = 32 << 20
    while _proj_vmem_bytes(tm, tkk, tn) > budget and tkk > 256:
        nt = _pick_tile(H, tkk // 2)
        if nt >= tkk:
            break
        tkk = nt
    while _proj_vmem_bytes(tm, tkk, tn) > budget and tm > 8:
        nt = _pick_tile(rows, tm // 2)
        if nt >= tm:
            break
        tm = nt

    grid = (N // tn, rows // tm, H // tkk)  # contraction axis innermost ("arbitrary")
    vmem_limit = int(min(max(_proj_vmem_bytes(tm, tkk, tn) * 5 // 4, 16 << 20), 48 << 20))

    return pl.pallas_call(
        _qkv_proj_kernel,
        out_shape=jax.ShapeDtypeStruct((rows, N), jnp.bfloat16),   # bf16 activations
        grid_spec=pltpu.PrefetchScalarGridSpec(
            num_scalar_prefetch=0,
            grid=grid,
            in_specs=[
                pl.BlockSpec((tm, tkk), lambda j, i, k: (i, k)),
                pl.BlockSpec((tkk, tn), lambda j, i, k: (k, j)),
                pl.BlockSpec((1, tn), lambda j, i, k: (0, j)),
            ],
            out_specs=pl.BlockSpec((tm, tn), lambda j, i, k: (i, j)),
            scratch_shapes=[pltpu.VMEM((tm, tn), jnp.float32)],
        ),
        compiler_params=pltpu.CompilerParams(
            dimension_semantics=("parallel", "parallel", "arbitrary"),
            vmem_limit_bytes=vmem_limit),
    )(x2, wqkv, bqkv)


# ------------------------------------------------------------------------ kernel 2: flash attention
def _flash_attn_kernel(q_ref, k_ref, v_ref, o_ref, m_sc, l_sc, acc_sc):
    # q_ref: (1, heads, tq, hd) bf16    k_ref / v_ref: (1, heads, tk, hd) bf16
    # o_ref: (1, tq, heads*hd)          m_sc / l_sc: (heads, tq, 1) f32   acc_sc: (heads, tq, hd) f32
    ki = pl.program_id(2)

    @pl.when(ki == 0)
    def _():
        m_sc[...] = jnp.full(m_sc.shape, -jnp.inf, m_sc.dtype)
        l_sc[...] = jnp.zeros(l_sc.shape, l_sc.dtype)
        acc_sc[...] = jnp.zeros(acc_sc.shape, acc_sc.dtype)

    q = q_ref[0]   # (heads, tq, hd); 1/sqrt(head_dim) already folded into Q
    k = k_ref[0]   # (heads, tk, hd)
    v = v_ref[0]   # (heads, tk, hd)

    # Head-batched scores on the MXU: bf16 operands, f32 accumulation.
    s = jnp.einsum("hqd,hkd->hqk", q, k, preferred_element_type=jnp.float32)

    m_prev = m_sc[...]
    m_new = jnp.maximum(m_prev, jnp.max(s, axis=-1, keepdims=True))
    alpha = jnp.exp(m_prev - m_new)                      # f32 softmax state throughout
    p = jnp.exp(s - m_new)
    l_sc[...] = alpha * l_sc[...] + jnp.sum(p, axis=-1, keepdims=True)
    acc_sc[...] = alpha * acc_sc[...] + jnp.einsum(
        "hqk,hkd->hqd", p.astype(jnp.bfloat16), v, preferred_element_type=jnp.float32)
    m_sc[...] = m_new

    @pl.when(ki == pl.num_programs(2) - 1)
    def _():
        heads, _, hd = acc_sc.shape
        inv_l = pl.reciprocal(l_sc[...], approx=True)    # EUP slot, essentially free
        out = acc_sc[...] * inv_l                        # (heads, tq, hd) f32
        # Each head's slab goes to lane offset h*hd: the output block is a lane-dense (tq, H)
        # tile already in the module's final (B, S, H) layout -> no wrapper merge transpose.
        for h in range(heads):
            o_ref[0, :, h * hd:(h + 1) * hd] = out[h].astype(o_ref.dtype)


def _attn_vmem_bytes(heads, tq, tk, hd, in_bytes, out_bytes):
    lane = 128
    qb = heads * _round_up(tq, 8) * _round_up(hd, lane) * in_bytes
    kvb = 2 * heads * _round_up(tk, 8) * _round_up(hd, lane) * in_bytes
    ob = _round_up(tq, 8) * _round_up(heads * hd, lane) * out_bytes
    blocks = 2 * (qb + kvb + ob)                               # double-buffered pipeline blocks
    ml = 2 * heads * _round_up(tq, 8) * lane * 4               # (heads, tq, 1) pads lanes to 128
    acc = heads * _round_up(tq, 8) * _round_up(hd, lane) * 4   # f32 accumulator
    sp = 2 * heads * _round_up(tq, 8) * _round_up(tk, lane) * 4  # s and p f32 temporaries
    return blocks + ml + acc + sp


def _flash_attention(q, k, v, out_dtype):
    B, heads, S, hd = q.shape
    H = heads * hd
    in_b = q.dtype.itemsize
    out_b = jnp.dtype(out_dtype).itemsize

    tq = _pick_tile(S, 256, (128, 8))
    tk = _pick_tile(S, 512, (128, 8))
    budget = 32 << 20
    while _attn_vmem_bytes(heads, tq, tk, hd, in_b, out_b) > budget and tk > 8:
        nt = _pick_tile(S, tk // 2, (128, 8))
        if nt >= tk:
            break
        tk = nt
    while _attn_vmem_bytes(heads, tq, tk, hd, in_b, out_b) > budget and tq > 8:
        nt = _pick_tile(S, tq // 2, (128, 8))
        if nt >= tq:
            break
        tq = nt

    grid = (B, S // tq, S // tk)
    vmem_limit = int(min(max(
        _attn_vmem_bytes(heads, tq, tk, hd, in_b, out_b) * 5 // 4, 16 << 20), 48 << 20))

    return pl.pallas_call(
        _flash_attn_kernel,
        out_shape=jax.ShapeDtypeStruct((B, S, H), out_dtype),
        grid_spec=pltpu.PrefetchScalarGridSpec(
            num_scalar_prefetch=0,
            grid=grid,
            in_specs=[
                pl.BlockSpec((1, heads, tq, hd), lambda b, qi, ki: (b, 0, qi, 0)),
                pl.BlockSpec((1, heads, tk, hd), lambda b, qi, ki: (b, 0, ki, 0)),
                pl.BlockSpec((1, heads, tk, hd), lambda b, qi, ki: (b, 0, ki, 0)),
            ],
            out_specs=pl.BlockSpec((1, tq, H), lambda b, qi, ki: (b, qi, 0)),
            scratch_shapes=[
                pltpu.VMEM((heads, tq, 1), jnp.float32),
                pltpu.VMEM((heads, tq, 1), jnp.float32),
                pltpu.VMEM((heads, tq, hd), jnp.float32),
            ],
        ),
        compiler_params=pltpu.CompilerParams(
            dimension_semantics=("parallel", "parallel", "arbitrary"),
            vmem_limit_bytes=vmem_limit),
    )(q, k, v)


# --------------------------------------------------------------------------------------- wrapper
def prepare_qkv_params(wq, bq, wk, bk, wv, bv, head_num):
    """Precompute fused QKV params once at weight-load time: transpose from PyTorch's (out, in)
    layout, fold the 1/sqrt(head_dim) softmax scale into the Q columns, cast weights to bf16."""
    H = wq.shape[0]
    assert H % head_num == 0, "hidden_dim must be divisible by head_num"
    scale = 1.0 / math.sqrt(H // head_num)
    wqkv = jnp.concatenate([wq.T * scale, wk.T, wv.T], axis=1).astype(jnp.bfloat16)  # (H, 3H)
    bqkv = jnp.concatenate([bq * scale, bk, bv]).reshape(1, 3 * H).astype(jnp.float32)
    return wqkv, bqkv


@partial(jax.jit, static_argnames=("head_num",))
def multi_attention(x, wqkv, bqkv, *, head_num):
    """Forward pass of MultiAttention (eval mode, masked=None).  Dropout is the eval identity."""
    B, S, H = x.shape
    hd = H // head_num

    qkv = _qkv_projection(x.reshape(B * S, H), wqkv, bqkv)        # (B*S, 3H) bf16

    # Head split (wrapper-side layout plumbing, bf16 -> half the HBM bytes of the f32 version).
    # TODO(synk): fold the head split into the attention BlockSpecs once sub-(8,128) minor block
    #             dims / in-kernel lane reshapes are safe across all TPU generations.
    qkv = qkv.reshape(B, S, 3, head_num, hd)
    q = jnp.transpose(qkv[:, :, 0], (0, 2, 1, 3))                 # (B, heads, S, hd)
    k = jnp.transpose(qkv[:, :, 1], (0, 2, 1, 3))
    v = jnp.transpose(qkv[:, :, 2], (0, 2, 1, 3))

    # Attention writes the final (B, S, H) layout directly; no merge transpose afterwards.
    return _flash_attention(q, k, v, out_dtype=x.dtype)


# ------------------------------------------------------------------------------------- reference
def _reference(x, wq, bq, wk, bk, wv, bv, head_num):
    """Plain-JAX f32 reference mirroring the PyTorch forward (eval mode, masked=None)."""
    B, S, H = x.shape
    hd = H // head_num

    def lin(t, w, b):
        return t @ w.T + b

    def split(t):
        return t.reshape(B, S, head_num, hd).transpose(0, 2, 1, 3)

    q, k, v = split(lin(x, wq, bq)), split(lin(x, wk, bk)), split(lin(x, wv, bv))
    s = jnp.einsum("bhqd,bhkd->bhqk", q, k) / math.sqrt(hd)
    p = jax.nn.softmax(s, axis=-1)
    o = jnp.einsum("bhqk,bhkd->bhqd", p, v)
    return o.transpose(0, 2, 1, 3).reshape(B, S, H)


def _run_case(key, B, S, H, heads):
    ks = jax.random.split(key, 7)
    bound = 1.0 / math.sqrt(H)  # PyTorch nn.Linear default init range
    x = jax.random.normal(ks[0], (B, S, H), dtype=jnp.float32)
    wq, wk, wv = (jax.random.uniform(k_, (H, H), minval=-bound, maxval=bound, dtype=jnp.float32)
                  for k_ in ks[1:4])
    bq, bk, bv = (jax.random.uniform(k_, (H,), minval=-bound, maxval=bound, dtype=jnp.float32)
                  for k_ in ks[4:7])

    wqkv, bqkv = prepare_qkv_params(wq, bq, wk, bk, wv, bv, heads)   # once, at weight-load time
    out = jax.block_until_ready(multi_attention(x, wqkv, bqkv, head_num=heads))
    ref = _reference(x, wq, bq, wk, bk, wv, bv, heads)

    assert out.shape == (B, S, H)
    assert out.dtype == x.dtype
    # tolerance covers the bf16 MXU operands (per perf guidance) + EUP approximate reciprocal
    assert jnp.allclose(out, ref, atol=2e-2, rtol=2e-2), \
        f"mismatch vs reference at B={B},S={S},H={H}"


if __name__ == "__main__":
    key = jax.random.PRNGKey(0)
    k_small, k_big = jax.random.split(key)

    # Small case consistent with the module (batch=2, seq=8, hidden=32, 4 heads).
    _run_case(k_small, B=2, S=8, H=32, heads=4)
    # Tile-aligned case (multiples of (8,128), head_dim=64) to validate layout behaviour as well.
    _run_case(k_big, B=2, S=128, H=256, heads=4)

    print("KERNEL_OK")
</pallas_src>

<mosaic_0001>
module attributes {stable_mosaic.version = 11 : i64} {
  func.func @_qkv_proj_kernel(%arg0: i32, %arg1: i32, %arg2: i32, %arg3: memref<16x32xf32, #tpu.memory_space<vmem>>, %arg4: memref<32x96xbf16, #tpu.memory_space<vmem>>, %arg5: memref<1x96xf32, #tpu.memory_space<vmem>>, %arg6: memref<16x96xbf16, #tpu.memory_space<vmem>>, %arg7: memref<16x96xf32, #tpu.memory_space<vmem>>) attributes {dimension_semantics = [#tpu.dimension_semantics<parallel>, #tpu.dimension_semantics<parallel>, #tpu.dimension_semantics<arbitrary>], iteration_bounds = array<i64: 1, 1, 1>, scalar_prefetch = 0 : i64, scratch_operands = 1 : i64, tpu.core_type = #tpu.core_type<tc>, window_params = [{transform_indices = @transform_0, window_bounds = array<i64: 16, 32>}, {transform_indices = @transform_1, window_bounds = array<i64: 32, 96>}, {transform_indices = @transform_2, window_bounds = array<i64: 1, 96>}, {transform_indices = @transform_3, window_bounds = array<i64: 16, 96>}]} {
    %c0_i32 = arith.constant 0 : i32
    %0 = arith.cmpi eq, %arg2, %c0_i32 : i32
    %1 = arith.extui %0 : i1 to i32
    %c0_i32_0 = arith.constant 0 : i32
    %2 = arith.cmpi ne, %1, %c0_i32_0 : i32
    scf.if %2 {
      %cst_10 = arith.constant 0.000000e+00 : f32
      %13 = vector.broadcast %cst_10 : f32 to vector<16x96xf32>
      %c0_11 = arith.constant 0 : index
      %c0_12 = arith.constant 0 : index
      %14 = vector.load %arg7[%c0_11, %c0_12] : memref<16x96xf32, #tpu.memory_space<vmem>>, vector<16x96xf32>
      tpu.vector_store %arg7[%c0_11, %c0_12], %13 {strides = array<i32>} : memref<16x96xf32, #tpu.memory_space<vmem>>, vector<16x96xf32>,
    } else {
    }
    %c0 = arith.constant 0 : index
    %c0_1 = arith.constant 0 : index
    %3 = vector.load %arg7[%c0, %c0_1] : memref<16x96xf32, #tpu.memory_space<vmem>>, vector<16x96xf32>
    %c0_2 = arith.constant 0 : index
    %c0_3 = arith.constant 0 : index
    %4 = vector.load %arg3[%c0_2, %c0_3] : memref<16x32xf32, #tpu.memory_space<vmem>>, vector<16x32xf32>
    %5 = arith.truncf %4 : vector<16x32xf32> to vector<16x32xbf16>
    %c0_4 = arith.constant 0 : index
    %c0_5 = arith.constant 0 : index
    %6 = vector.load %arg4[%c0_4, %c0_5] : memref<32x96xbf16, #tpu.memory_space<vmem>>, vector<32x96xbf16>
    %cst = arith.constant dense<0.000000e+00> : vector<16x96xf32>
    %7 = tpu.matmul %5, %6, %cst {dimension_numbers = #tpu.dot_dimension_numbers<[1], [0], [0], [1], [0, 0, 1, 1], [], []>} : vector<16x32xbf16>, vector<32x96xbf16>, vector<16x96xf32> -> vector<16x96xf32>
    %8 = arith.addf %3, %7 : vector<16x96xf32>
    %c0_6 = arith.constant 0 : index
    %c0_7 = arith.constant 0 : index
    %9 = vector.load %arg7[%c0_6, %c0_7] : memref<16x96xf32, #tpu.memory_space<vmem>>, vector<16x96xf32>
    tpu.vector_store %arg7[%c0_6, %c0_7], %8 {strides = array<i32>} : memref<16x96xf32, #tpu.memory_space<vmem>>, vector<16x96xf32>,
    %c0_i32_8 = arith.constant 0 : i32
    %10 = arith.cmpi eq, %arg2, %c0_i32_8 : i32
    %11 = arith.extui %10 : i1 to i32
    %c0_i32_9 = arith.constant 0 : i32
    %12 = arith.cmpi ne, %11, %c0_i32_9 : i32
    scf.if %12 {
      %c0_10 = arith.constant 0 : index
      %c0_11 = arith.constant 0 : index
      %13 = vector.load %arg7[%c0_10, %c0_11] : memref<16x96xf32, #tpu.memory_space<vmem>>, vector<16x96xf32>
      %c0_12 = arith.constant 0 : index
      %c0_13 = arith.constant 0 : index
      %14 = vector.load %arg5[%c0_12, %c0_13] : memref<1x96xf32, #tpu.memory_space<vmem>>, vector<1x96xf32>
      %15 = vector.broadcast %14 : vector<1x96xf32> to vector<16x96xf32>
      %16 = arith.addf %13, %15 : vector<16x96xf32>
      %17 = arith.truncf %16 : vector<16x96xf32> to vector<16x96xbf16>
      %c0_14 = arith.constant 0 : index
      %c0_15 = arith.constant 0 : index
      %18 = vector.load %arg6[%c0_14, %c0_15] : memref<16x96xbf16, #tpu.memory_space<vmem>>, vector<16x96xbf16>
      tpu.vector_store %arg6[%c0_14, %c0_15], %17 {strides = array<i32>} : memref<16x96xbf16, #tpu.memory_space<vmem>>, vector<16x96xbf16>,
    } else {
    }
    return
  }
  func.func @transform_0(%arg0: i32, %arg1: i32, %arg2: i32) -> (i32, i32) {
    %c0_i32 = arith.constant 0 : i32
    return %arg1, %arg2 : i32, i32
  }
  func.func @transform_1(%arg0: i32, %arg1: i32, %arg2: i32) -> (i32, i32) {
    %c0_i32 = arith.constant 0 : i32
    return %arg2, %arg0 : i32, i32
  }
  func.func @transform_2(%arg0: i32, %arg1: i32, %arg2: i32) -> (i32, i32) {
    %c0_i32 = arith.constant 0 : i32
    %c0_i32_0 = arith.constant 0 : i32
    return %c0_i32, %arg0 : i32, i32
  }
  func.func @transform_3(%arg0: i32, %arg1: i32, %arg2: i32) -> (i32, i32) {
    %c0_i32 = arith.constant 0 : i32
    return %arg1, %arg0 : i32, i32
  }
}

module attributes {stable_mosaic.version = 11 : i64} {
  func.func @_flash_attn_kernel(%arg0: i32, %arg1: i32, %arg2: i32, %arg3: memref<1x4x8x8xbf16, #tpu.memory_space<vmem>>, %arg4: memref<1x4x8x8xbf16, #tpu.memory_space<vmem>>, %arg5: memref<1x4x8x8xbf16, #tpu.memory_space<vmem>>, %arg6: memref<1x8x32xf32, #tpu.memory_space<vmem>>, %arg7: memref<4x8x1xf32, #tpu.memory_space<vmem>>, %arg8: memref<4x8x1xf32, #tpu.memory_space<vmem>>, %arg9: memref<4x8x8xf32, #tpu.memory_space<vmem>>) attributes {dimension_semantics = [#tpu.dimension_semantics<parallel>, #tpu.dimension_semantics<parallel>, #tpu.dimension_semantics<arbitrary>], iteration_bounds = array<i64: 2, 1, 1>, scalar_prefetch = 0 : i64, scratch_operands = 3 : i64, tpu.core_type = #tpu.core_type<tc>, window_params = [{transform_indices = @transform_0, window_bounds = array<i64: 1, 4, 8, 8>}, {transform_indices = @transform_1, window_bounds = array<i64: 1, 4, 8, 8>}, {transform_indices = @transform_2, window_bounds = array<i64: 1, 4, 8, 8>}, {transform_indices = @transform_3, window_bounds = array<i64: 1, 8, 32>}]} {
    %c0_i32 = arith.constant 0 : i32
    %0 = arith.cmpi eq, %arg2, %c0_i32 : i32
    %1 = arith.extui %0 : i1 to i32
    %c0_i32_0 = arith.constant 0 : i32
    %2 = arith.cmpi ne, %1, %c0_i32_0 : i32
    scf.if %2 {
      %cst_35 = arith.constant 0xFF800000 : f32
      %36 = vector.broadcast %cst_35 : f32 to vector<4x8x1xf32>
      %c0_36 = arith.constant 0 : index
      %c0_37 = arith.constant 0 : index
      %c0_38 = arith.constant 0 : index
      %37 = vector.load %arg7[%c0_36, %c0_37, %c0_38] : memref<4x8x1xf32, #tpu.memory_space<vmem>>, vector<4x8x1xf32>
      tpu.vector_store %arg7[%c0_36, %c0_37, %c0_38], %36 {strides = array<i32>} : memref<4x8x1xf32, #tpu.memory_space<vmem>>, vector<4x8x1xf32>,
      %cst_39 = arith.constant 0.000000e+00 : f32
      %38 = vector.broadcast %cst_39 : f32 to vector<4x8x1xf32>
      %c0_40 = arith.constant 0 : index
      %c0_41 = arith.constant 0 : index
      %c0_42 = arith.constant 0 : index
      %39 = vector.load %arg8[%c0_40, %c0_41, %c0_42] : memref<4x8x1xf32, #tpu.memory_space<vmem>>, vector<4x8x1xf32>
      tpu.vector_store %arg8[%c0_40, %c0_41, %c0_42], %38 {strides = array<i32>} : memref<4x8x1xf32, #tpu.memory_space<vmem>>, vector<4x8x1xf32>,
      %cst_43 = arith.constant 0.000000e+00 : f32
      %40 = vector.broadcast %cst_43 : f32 to vector<4x8x8xf32>
      %c0_44 = arith.constant 0 : index
      %c0_45 = arith.constant 0 : index
      %c0_46 = arith.constant 0 : index
      %41 = vector.load %arg9[%c0_44, %c0_45, %c0_46] : memref<4x8x8xf32, #tpu.memory_space<vmem>>, vector<4x8x8xf32>
      tpu.vector_store %arg9[%c0_44, %c0_45, %c0_46], %40 {strides = array<i32>} : memref<4x8x8xf32, #tpu.memory_space<vmem>>, vector<4x8x8xf32>,
    } else {
    }
    %c0 = arith.constant 0 : index
    %c0_1 = arith.constant 0 : index
    %c0_2 = arith.constant 0 : index
    %c0_3 = arith.constant 0 : index
    %3 = vector.load %arg3[%c0, %c0_1, %c0_2, %c0_3] : memref<1x4x8x8xbf16, #tpu.memory_space<vmem>>, vector<1x4x8x8xbf16>
    %4 = vector.shape_cast %3 : vector<1x4x8x8xbf16> to vector<4x8x8xbf16>
    %c0_4 = arith.constant 0 : index
    %c0_5 = arith.constant 0 : index
    %c0_6 = arith.constant 0 : index
    %c0_7 = arith.constant 0 : index
    %5 = vector.load %arg4[%c0_4, %c0_5, %c0_6, %c0_7] : memref<1x4x8x8xbf16, #tpu.memory_space<vmem>>, vector<1x4x8x8xbf16>
    %6 = vector.shape_cast %5 : vector<1x4x8x8xbf16> to vector<4x8x8xbf16>
    %c0_8 = arith.constant 0 : index
    %c0_9 = arith.constant 0 : index
    %c0_10 = arith.constant 0 : index
    %c0_11 = arith.constant 0 : index
    %7 = vector.load %arg5[%c0_8, %c0_9, %c0_10, %c0_11] : memref<1x4x8x8xbf16, #tpu.memory_space<vmem>>, vector<1x4x8x8xbf16>
    %8 = vector.shape_cast %7 : vector<1x4x8x8xbf16> to vector<4x8x8xbf16>
    "tpu.trace_start"() <{level = 10 : i32, message = "hqd,hkd->hqk"}> : () -> ()
    %cst = arith.constant dense<0.000000e+00> : vector<4x8x8xf32>
    %9 = tpu.matmul %4, %6, %cst {dimension_numbers = #tpu.dot_dimension_numbers<[2], [2], [1], [1], [0, 0, 0, 1, 1, 1], [0], [0]>} : vector<4x8x8xbf16>, vector<4x8x8xbf16>, vector<4x8x8xf32> -> vector<4x8x8xf32>
    "tpu.trace_stop"() : () -> ()
    %c0_12 = arith.constant 0 : index
    %c0_13 = arith.constant 0 : index
    %c0_14 = arith.constant 0 : index
    %10 = vector.load %arg7[%c0_12, %c0_13, %c0_14] : memref<4x8x1xf32, #tpu.memory_space<vmem>>, vector<4x8x1xf32>
    %cst_15 = arith.constant dense<0xFF800000> : vector<4x8xf32>
    %11 = vector.multi_reduction <maximumf>, %9, %cst_15 [2] : vector<4x8x8xf32> to vector<4x8xf32>
    %12 = vector.shape_cast %11 : vector<4x8xf32> to vector<4x8x1xf32>
    %13 = arith.maximumf %10, %12 : vector<4x8x1xf32>
    %14 = arith.subf %10, %13 : vector<4x8x1xf32>
    %15 = math.exp %14 : vector<4x8x1xf32>
    %16 = vector.broadcast %13 : vector<4x8x1xf32> to vector<4x8x8xf32>
    %17 = arith.subf %9, %16 : vector<4x8x8xf32>
    %18 = math.exp %17 : vector<4x8x8xf32>
    %c0_16 = arith.constant 0 : index
    %c0_17 = arith.constant 0 : index
    %c0_18 = arith.constant 0 : index
    %19 = vector.load %arg8[%c0_16, %c0_17, %c0_18] : memref<4x8x1xf32, #tpu.memory_space<vmem>>, vector<4x8x1xf32>
    %20 = arith.mulf %15, %19 : vector<4x8x1xf32>
    %cst_19 = arith.constant dense<0.000000e+00> : vector<4x8xf32>
    %21 = vector.multi_reduction <add>, %18, %cst_19 [2] : vector<4x8x8xf32> to vector<4x8xf32>
    %22 = vector.shape_cast %21 : vector<4x8xf32> to vector<4x8x1xf32>
    %23 = arith.addf %20, %22 : vector<4x8x1xf32>
    %c0_20 = arith.constant 0 : index
    %c0_21 = arith.constant 0 : index
    %c0_22 = arith.constant 0 : index
    %24 = vector.load %arg8[%c0_20, %c0_21, %c0_22] : memref<4x8x1xf32, #tpu.memory_space<vmem>>, vector<4x8x1xf32>
    tpu.vector_store %arg8[%c0_20, %c0_21, %c0_22], %23 {strides = array<i32>} : memref<4x8x1xf32, #tpu.memory_space<vmem>>, vector<4x8x1xf32>,
    %c0_23 = arith.constant 0 : index
    %c0_24 = arith.constant 0 : index
    %c0_25 = arith.constant 0 : index
    %25 = vector.load %arg9[%c0_23, %c0_24, %c0_25] : memref<4x8x8xf32, #tpu.memory_space<vmem>>, vector<4x8x8xf32>
    %26 = vector.broadcast %15 : vector<4x8x1xf32> to vector<4x8x8xf32>
    %27 = arith.mulf %26, %25 : vector<4x8x8xf32>
    %28 = arith.truncf %18 : vector<4x8x8xf32> to vector<4x8x8xbf16>
    "tpu.trace_start"() <{level = 10 : i32, message = "hqk,hkd->hqd"}> : () -> ()
    %cst_26 = arith.constant dense<0.000000e+00> : vector<4x8x8xf32>
    %29 = tpu.matmul %28, %8, %cst_26 {dimension_numbers = #tpu.dot_dimension_numbers<[2], [1], [1], [2], [0, 0, 0, 1, 1, 2], [0], [0]>} : vector<4x8x8xbf16>, vector<4x8x8xbf16>, vector<4x8x8xf32> -> vector<4x8x8xf32>
    "tpu.trace_stop"() : () -> ()
    %30 = arith.addf %27, %29 : vector<4x8x8xf32>
    %c0_27 = arith.constant 0 : index
    %c0_28 = arith.constant 0 : index
    %c0_29 = arith.constant 0 : index
    %31 = vector.load %arg9[%c0_27, %c0_28, %c0_29] : memref<4x8x8xf32, #tpu.memory_space<vmem>>, vector<4x8x8xf32>
    tpu.vector_store %arg9[%c0_27, %c0_28, %c0_29], %30 {strides = array<i32>} : memref<4x8x8xf32, #tpu.memory_space<vmem>>, vector<4x8x8xf32>,
    %c0_30 = arith.constant 0 : index
    %c0_31 = arith.constant 0 : index
    %c0_32 = arith.constant 0 : index
    %32 = vector.load %arg7[%c0_30, %c0_31, %c0_32] : memref<4x8x1xf32, #tpu.memory_space<vmem>>, vector<4x8x1xf32>
    tpu.vector_store %arg7[%c0_30, %c0_31, %c0_32], %13 {strides = array<i32>} : memref<4x8x1xf32, #tpu.memory_space<vmem>>, vector<4x8x1xf32>,
    %c0_i32_33 = arith.constant 0 : i32
    %33 = arith.cmpi eq, %arg2, %c0_i32_33 : i32
    %34 = arith.extui %33 : i1 to i32
    %c0_i32_34 = arith.constant 0 : i32
    %35 = arith.cmpi ne, %34, %c0_i32_34 : i32
    scf.if %35 {
      %c0_35 = arith.constant 0 : index
      %c0_36 = arith.constant 0 : index
      %c0_37 = arith.constant 0 : index
      %36 = vector.load %arg8[%c0_35, %c0_36, %c0_37] : memref<4x8x1xf32, #tpu.memory_space<vmem>>, vector<4x8x1xf32>
      %37 = tpu.reciprocal %36 {approx = true} : vector<4x8x1xf32> -> vector<4x8x1xf32>
      %c0_38 = arith.constant 0 : index
      %c0_39 = arith.constant 0 : index
      %c0_40 = arith.constant 0 : index
      %38 = vector.load %arg9[%c0_38, %c0_39, %c0_40] : memref<4x8x8xf32, #tpu.memory_space<vmem>>, vector<4x8x8xf32>
      %39 = vector.broadcast %37 : vector<4x8x1xf32> to vector<4x8x8xf32>
      %40 = arith.mulf %38, %39 : vector<4x8x8xf32>
      %41 = vector.extract_strided_slice %40 {offsets = [0, 0, 0], sizes = [1, 8, 8], strides = [1, 1, 1]} : vector<4x8x8xf32> to vector<1x8x8xf32>
      %42 = vector.shape_cast %41 : vector<1x8x8xf32> to vector<8x8xf32>
      %c0_41 = arith.constant 0 : index
      %c0_42 = arith.constant 0 : index
      %c0_43 = arith.constant 0 : index
      %43 = vector.load %arg6[%c0_41, %c0_42, %c0_43] : memref<1x8x32xf32, #tpu.memory_space<vmem>>, vector<1x8x8xf32>
      %44 = vector.shape_cast %43 : vector<1x8x8xf32> to vector<8x8xf32>
      %45 = vector.shape_cast %42 : vector<8x8xf32> to vector<1x8x8xf32>
      tpu.vector_store %arg6[%c0_41, %c0_42, %c0_43], %45 {strides = array<i32>} : memref<1x8x32xf32, #tpu.memory_space<vmem>>, vector<1x8x8xf32>,
      %46 = vector.extract_strided_slice %40 {offsets = [1, 0, 0], sizes = [1, 8, 8], strides = [1, 1, 1]} : vector<4x8x8xf32> to vector<1x8x8xf32>
      %47 = vector.shape_cast %46 : vector<1x8x8xf32> to vector<8x8xf32>
      %c0_44 = arith.constant 0 : index
      %c0_45 = arith.constant 0 : index
      %c8 = arith.constant 8 : index
      %48 = vector.load %arg6[%c0_44, %c0_45, %c8] : memref<1x8x32xf32, #tpu.memory_space<vmem>>, vector<1x8x8xf32>
      %49 = vector.shape_cast %48 : vector<1x8x8xf32> to vector<8x8xf32>
      %50 = vector.shape_cast %47 : vector<8x8xf32> to vector<1x8x8xf32>
      tpu.vector_store %arg6[%c0_44, %c0_45, %c8], %50 {strides = array<i32>} : memref<1x8x32xf32, #tpu.memory_space<vmem>>, vector<1x8x8xf32>,
      %51 = vector.extract_strided_slice %40 {offsets = [2, 0, 0], sizes = [1, 8, 8], strides = [1, 1, 1]} : vector<4x8x8xf32> to vector<1x8x8xf32>
      %52 = vector.shape_cast %51 : vector<1x8x8xf32> to vector<8x8xf32>
      %c0_46 = arith.constant 0 : index
      %c0_47 = arith.constant 0 : index
      %c16 = arith.constant 16 : index
      %53 = vector.load %arg6[%c0_46, %c0_47, %c16] : memref<1x8x32xf32, #tpu.memory_space<vmem>>, vector<1x8x8xf32>
      %54 = vector.shape_cast %53 : vector<1x8x8xf32> to vector<8x8xf32>
      %55 = vector.shape_cast %52 : vector<8x8xf32> to vector<1x8x8xf32>
      tpu.vector_store %arg6[%c0_46, %c0_47, %c16], %55 {strides = array<i32>} : memref<1x8x32xf32, #tpu.memory_space<vmem>>, vector<1x8x8xf32>,
      %56 = vector.extract_strided_slice %40 {offsets = [3, 0, 0], sizes = [1, 8, 8], strides = [1, 1, 1]} : vector<4x8x8xf32> to vector<1x8x8xf32>
      %57 = vector.shape_cast %56 : vector<1x8x8xf32> to vector<8x8xf32>
      %c0_48 = arith.constant 0 : index
      %c0_49 = arith.constant 0 : index
      %c24 = arith.constant 24 : index
      %58 = vector.load %arg6[%c0_48, %c0_49, %c24] : memref<1x8x32xf32, #tpu.memory_space<vmem>>, vector<1x8x8xf32>
      %59 = vector.shape_cast %58 : vector<1x8x8xf32> to vector<8x8xf32>
      %60 = vector.shape_cast %57 : vector<8x8xf32> to vector<1x8x8xf32>
      tpu.vector_store %arg6[%c0_48, %c0_49, %c24], %60 {strides = array<i32>} : memref<1x8x32xf32, #tpu.memory_space<vmem>>, vector<1x8x8xf32>,
    } else {
    }
    return
  }
  func.func @transform_0(%arg0: i32, %arg1: i32, %arg2: i32) -> (i32, i32, i32, i32) {
    %c0_i32 = arith.constant 0 : i32
    %c0_i32_0 = arith.constant 0 : i32
    %c0_i32_1 = arith.constant 0 : i32
    return %arg0, %c0_i32, %arg1, %c0_i32_0 : i32, i32, i32, i32
  }
  func.func @transform_1(%arg0: i32, %arg1: i32, %arg2: i32) -> (i32, i32, i32, i32) {
    %c0_i32 = arith.constant 0 : i32
    %c0_i32_0 = arith.constant 0 : i32
    %c0_i32_1 = arith.constant 0 : i32
    return %arg0, %c0_i32, %arg2, %c0_i32_0 : i32, i32, i32, i32
  }
  func.func @transform_2(%arg0: i32, %arg1: i32, %arg2: i32) -> (i32, i32, i32, i32) {
    %c0_i32 = arith.constant 0 : i32
    %c0_i32_0 = arith.constant 0 : i32
    %c0_i32_1 = arith.constant 0 : i32
    return %arg0, %c0_i32, %arg2, %c0_i32_0 : i32, i32, i32, i32
  }
  func.func @transform_3(%arg0: i32, %arg1: i32, %arg2: i32) -> (i32, i32, i32) {
    %c0_i32 = arith.constant 0 : i32
    %c0_i32_0 = arith.constant 0 : i32
    return %arg0, %arg1, %c0_i32 : i32, i32, i32
  }
}

</mosaic_0001>

<llo_original>
// kernel: multi_attention.2
$region0: #{multi_attention.2}
  #allocation0 [shape = 'u32[]', space=smem, size = 0x4, offset = 0x4, fixed_abs, tag = 'smem constant byte address 0x4 - core index']
  #allocation1 [shape = 'u32[144,128]{1,0:T(1,128)}', space=vmem, size = 0x12000, scoped, tag = 'internal scratch']
  #allocation2 [shape = 'f32[16,96]{1,0:T(8,128)}', space=vmem, size = 0x2000, scoped, tag = 'scratch operand']
  %s0 = inlined_call_operand.hbm [shape: f32[16,32], index: 0, kind: input, shape index: {}]
  %s1 = inlined_call_operand.hbm [shape: bf16[32,96], index: 1, kind: input, shape index: {}]
  %s2 = inlined_call_operand.vmem [shape: f32[1,96], index: 2, kind: input, shape index: {}]
  %s3 = inlined_call_operand.vmem [shape: bf16[16,96], index: 3, kind: output, shape index: {}]
  %s4 = sld [smem:[#allocation0]]
  $region38: #{multi_attention.2} parent=0
    _
  %s6 = ssub.s32 1, %s4
  %s7 = scalar_select 0, %s6, %s4
  $region1: #{multi_attention.2} parent=0
    #allocation3 [shape = 'u8[8192]{0}', space=vmem, size = 0x2000, scoped, tag = 'input window, operand 0, single buffered']
    #allocation4 [shape = 's32[1]{0}', space=sflag, size = 0x4, scoped, tag = 'scoped memory for multi_attention.2']
    #allocation5 [shape = 'u8[8192]{0}', space=vmem, size = 0x2000, scoped, tag = 'input window, operand 1, single buffered']
    #allocation6 [shape = 's32[1]{0}', space=sflag, size = 0x4, scoped, tag = 'scoped memory for multi_attention.2']
    %8 = vsyncpa [#allocation4], 0
    %9 = vsyncpa [#allocation6], 0
    // Predicated region
    $region2: #{multi_attention.2} parent=1 // pred_check
      _
    $region3: #{multi_attention.2} parent=1 // pred_check_branch
      %11 = sbr.rel (0) target = $region5
    $region4: #{multi_attention.2} parent=1 // pred_region
      %s13 = ssub.s32 256, 256
      %14 = vsyncadd [#allocation4], %s13
      %s15 = sshll.u32 [#allocation3], 4
      %s16 = int_to_ptr.vmem [resolvable:$true] %s15
      %21 = dma.hbm_to_vmem [thread:$0]  %s0, 256, %s16, [#allocation4], 128, 128, 8
    $region5: #{multi_attention.2} parent=1 // pred_fallthru
      _
    // Predicated region
    $region6: #{multi_attention.2} parent=1 // pred_check
      _
    $region7: #{multi_attention.2} parent=1 // pred_check_branch
      %23 = sbr.rel (0) target = $region9
    $region8: #{multi_attention.2} parent=1 // pred_region
      %s25 = ssub.s32 256, 256
      %26 = vsyncadd [#allocation6], %s25
      %s27 = sshll.u32 [#allocation5], 4
      %s28 = int_to_ptr.vmem [resolvable:$true] %s27
      %33 = dma.hbm_to_vmem [thread:$0]  %s1, 256, %s28, [#allocation6], 64, 64, 4
    $region9: #{multi_attention.2} parent=1 // pred_fallthru
      _
    // Predicated region
    $region10: #{multi_attention.2} parent=1 // pred_check
      _
    $region11: #{multi_attention.2} parent=1 // pred_check_branch
      %35 = sbr.rel (0) target = $region13
    $region12: #{multi_attention.2} parent=1 // pred_region
      _
    $region13: #{multi_attention.2} parent=1 // pred_fallthru
      _
    // Predicated region
    $region14: #{multi_attention.2} parent=1 // pred_check
      _
    $region15: #{multi_attention.2} parent=1 // pred_check_branch
      %37 = sbr.rel (0) target = $region17
    $region16: #{multi_attention.2} parent=1 // pred_region
      %38 = dma.done [#allocation4], 256
    $region17: #{multi_attention.2} parent=1 // pred_fallthru
      _
    // Predicated region
    $region18: #{multi_attention.2} parent=1 // pred_check
      _
    $region19: #{multi_attention.2} parent=1 // pred_check_branch
      %40 = sbr.rel (0) target = $region21
    $region20: #{multi_attention.2} parent=1 // pred_region
      %41 = dma.done [#allocation6], 256
    $region21: #{multi_attention.2} parent=1 // pred_fallthru
      _
    %p43 = scmp.eq.s32.totalorder 0, 0
    // Predicated region
    $region22: #{multi_attention.2} parent=1 // pred_check
      %p44 = pneg %p43
    $region23: #{multi_attention.2} parent=1 // pred_check_branch
      %46 = sbr.rel (%p44) target = $region25
    $region24: #{multi_attention.2} parent=1 // pred_region
      %vm47 = vcmask 785408
      %48 = vst.msk [vmem:[#allocation2] sm:$0xff] %vm47, 0.0
      %49 = vst.msk [vmem:[#allocation2 + $0x8] sm:$0xff] %vm47, 0.0
    $region25: #{multi_attention.2} parent=1 // pred_fallthru
      _
    %v50 = vld [vmem:[#allocation2] sm:$0xff]
    %v51 = vld [vmem:[#allocation2 + $0x8] sm:$0xff]
    %v52 = vld [vmem:[#allocation3] sm:$0xff]
    %v53 = vld [vmem:[#allocation3 + $0x8] sm:$0xff]
    %v54 = vpack.c.bf16 %v53, %v52
    %v55 = vld [vmem:[#allocation5] sm:$0xf]
    %v56 = vld [vmem:[#allocation5 + $0x4] sm:$0xf]
    %v57 = vld [vmem:[#allocation5 + $0x8] sm:$0xf]
    %v58 = vld [vmem:[#allocation5 + $0xc] sm:$0xf]
    %v63 = vunpack.c.l.b16 %v55
    %v64 = vunpack.c.l.b16 %v56
    %v65 = vunpack.c.l.b16 %v57
    %v66 = vunpack.c.l.b16 %v58
    %v67 = vpack.c.b16 %v64, %v63
    %v68 = vpack.c.b16 %v66, %v65
    %vm71 = vcmask 261120
    %v73 = vsel %vm71, %v54, 0
    %75 = vmatprep.subr.bf16.mxu0 0
    %76 = vmatpush1.bf16.msra.mxu0 %v67
    %77 = vmatprep.subr.bf16.mxu0 0
    %78 = vmatpush1.bf16.msra.mxu0 %v68
    %79 = vmatprep.subr.bf16.mxu0 0
    %80 = vmatpush1.bf16.msra.mxu0 0
    %81 = vmatprep.subr.bf16.mxu0 0
    %82 = vmatpush1.bf16.msra.mxu0 0
    %83 = vmatprep.subr.bf16.mxu0 0
    %84 = vmatpush1.bf16.msra.mxu0 0
    %85 = vmatprep.subr.bf16.mxu0 0
    %86 = vmatpush1.bf16.msra.mxu0 0
    %87 = vmatprep.subr.bf16.mxu0 0
    %88 = vmatpush1.bf16.msra.mxu0 0
    %89 = vmatprep.subr.bf16.mxu0 0
    %90 = vmatpush1.bf16.msra.mxu0 0
    %91 = vmatprep.subr.bf16.mxu0 0
    %92 = vmatpush1.bf16.msra.mxu0 0
    %93 = vmatprep.subr.bf16.mxu0 0
    %94 = vmatpush1.bf16.msra.mxu0 0
    %95 = vmatprep.subr.bf16.mxu0 0
    %96 = vmatpush1.bf16.msra.mxu0 0
    %97 = vmatprep.subr.bf16.mxu0 0
    %98 = vmatpush1.bf16.msra.mxu0 0
    %99 = vmatprep.subr.bf16.mxu0 0
    %100 = vmatpush1.bf16.msra.mxu0 0
    %101 = vmatprep.subr.bf16.mxu0 0
    %102 = vmatpush1.bf16.msra.mxu0 0
    %103 = vmatprep.subr.bf16.mxu0 0
    %104 = vmatpush1.bf16.msra.mxu0 0
    %105 = vmatprep.subr.bf16.mxu0 0
    %106 = vmatpush1.bf16.msra.mxu0 0
    %107 = vmatprep.mubr.bf16.mxu0 0
    %108 = vmatmul.mubr.bf16.gmra.mrb[0].mxu0 %v73
    %v109 = vpop.f32.mrb[0].mxu0
    %v110 = vadd.f32 0.0, %v109
    %v111 = vpop.f32.mrb[0].mxu0
    %v112 = vpop.f32.mrb[0].mxu0
    %v113 = vadd.f32 0.0, %v112
    %v114 = vpop.f32.mrb[0].mxu0
    %115 = vdwg.mxu0
    %v116 = vadd.f32 %v50, %v110
    %v117 = vadd.f32 %v51, %v113
    %vm118 = vcmask 785408
    %119 = vst.msk [vmem:[#allocation2] sm:$0xff] %vm118, %v116
    %120 = vst.msk [vmem:[#allocation2 + $0x8] sm:$0xff] %vm118, %v117
    // Predicated region
    $region26: #{multi_attention.2} parent=1 // pred_check
      %p121 = pneg %p43
    $region27: #{multi_attention.2} parent=1 // pred_check_branch
      %123 = sbr.rel (%p121) target = $region29
    $region28: #{multi_attention.2} parent=1 // pred_region
      %v124 = vld [vmem:[#allocation2] sm:$0xff]
      %v125 = vld [vmem:[#allocation2 + $0x8] sm:$0xff]
      %v126 = vld [vmem:[%s2] sm:$0x1]
      %v128 = vlaneseq
      %v129 = vshrl.u32 %v128, 7
      %v130 = vsub.s32 0, %v129
      %v131 = vrot.slane %v126, %v130
      %v133 = vadd.f32 %v124, %v131
      %v134 = vadd.f32 %v125, %v131
      %v135 = vpack.c.bf16 %v134, %v133
      %v137 = vunpack.c.l.b16 %v135
      %v138 = vunpack.c.h.b16 %v135
      %v139 = vpack.c.b16 %v137, %v137
      %v140 = vpack.c.b16 %v138, %v138
      %vm143 = vcmask 781312
      %144 = vst.msk [vmem:[%s3] sm:$0xf] %vm143, %v139
      %145 = vst.msk [vmem:[%s3 + $0x4] sm:$0xf] %vm143, %v140
    $region29: #{multi_attention.2} parent=1 // pred_fallthru
      _
    // Predicated region
    $region30: #{multi_attention.2} parent=1 // pred_check
      _
    $region31: #{multi_attention.2} parent=1 // pred_check_branch
      %147 = sbr.rel (0) target = $region33
    $region32: #{multi_attention.2} parent=1 // pred_region
      _
    $region33: #{multi_attention.2} parent=1 // pred_fallthru
      _
    // Predicated region
    $region34: #{multi_attention.2} parent=1 // pred_check
      _
    $region35: #{multi_attention.2} parent=1 // pred_check_branch
      %149 = sbr.rel (0) target = $region37
    $region36: #{multi_attention.2} parent=1 // pred_region
      _
    $region37: #{multi_attention.2} parent=1 // pred_fallthru
      _
    %150 = vsyncpa [#allocation4], 1
    %151 = vsyncpa [#allocation6], 1

// kernel: multi_attention.3
$region0: #{multi_attention.3}
  #allocation0 [shape = 'u32[]', space=smem, size = 0x4, offset = 0x4, fixed_abs, tag = 'smem constant byte address 0x4 - core index']
  #allocation1 [shape = 'u32[144,128]{1,0:T(1,128)}', space=vmem, size = 0x12000, scoped, tag = 'internal scratch']
  #allocation2 [shape = 'f32[4,8,1]{2,1,0:T(8,128)}', space=vmem, size = 0x4000, scoped, tag = 'scratch operand']
  #allocation3 [shape = 'f32[4,8,1]{2,1,0:T(8,128)}', space=vmem, size = 0x4000, scoped, tag = 'scratch operand']
  #allocation4 [shape = 'f32[4,8,8]{2,1,0:T(8,128)}', space=vmem, size = 0x4000, scoped, tag = 'scratch operand']
  %s0 = inlined_call_operand.vmem [shape: bf16[2,4,8,8], index: 0, kind: input, shape index: {}]
  %s1 = inlined_call_operand.vmem [shape: bf16[2,4,8,8], index: 1, kind: input, shape index: {}]
  %s2 = inlined_call_operand.vmem [shape: bf16[2,4,8,8], index: 2, kind: input, shape index: {}]
  %s3 = inlined_call_operand.hbm [shape: f32[2,8,32], index: 3, kind: output, shape index: {}]
  %s4 = sld [smem:[#allocation0]]
  $region53: #{multi_attention.3} parent=0
    _
  %s6 = ssub.s32 1, %s4
  %s7 = scalar_select 0, %s6, %s4
  $region1: #{multi_attention.3} parent=0
    #allocation5 [shape = 'u8[8192]{0}', space=vmem, size = 0x2000, scoped, tag = 'output window, operand 0']
    #allocation6 [shape = 's32[2]{0}', space=sflag, size = 0x8, scoped, tag = 'scoped memory for multi_attention.3']
    %8 = vsyncpa [#allocation6], 0
    %s9 = scalar_lea.sflag [#allocation6], 1
    %10 = vsyncpa %s9, 0
    loop: start=0, step=1, limit=4
    $region2: #{multi_attention.3} parent=1 // loop_pre_header
      _
    $region3: #{multi_attention.3} parent=1 // loop_header
      %s12 = sphi 0, %s16
      %p13 = scmp.ge.s32.totalorder %s12, 4
      %s19 = sphi 0, %s38
      %s20 = sphi 0, %s34
      %s21 = sphi 0, %s30
      %s22 = sphi 0, %s19
      %s23 = sphi 0, %s20
      %s24 = sphi 0, %s21
      %s25 = sphi 0, %s22
      %s26 = sphi 0, %s23
      %s27 = sphi 0, %s24
      %s43 = sphi 0, %s45
      %s46 = sphi 0, %s43
      %s47 = sphi 0, %s46
      %s63 = sphi 0, %s47
      %s71 = sphi 0, %s73
      %s74 = sphi 0, %s71
      %s75 = sphi 0, %s74
      %s91 = sphi 0, %s75
      %s99 = sphi 0, %s101
      %s102 = sphi 0, %s99
      %s103 = sphi 0, %s102
      %s119 = sphi 0, %s103
      %s127 = sphi 0, %s129
      %s130 = sphi 0, %s127
      %s131 = sphi 0, %s130
      %s147 = sphi 0, %s131
    $region4: #{multi_attention.3} parent=1 // loop_header_branch
      %15 = sbr.rel (%p13) target = $region8
    $region5: #{multi_attention.3} parent=1 // loop_body
      %s17 = ssub.s32 %s12, 1
      %s18 = ssub.s32 %s12, 2
      %s28 = sadd.s32 1, %s21
      %p29 = scmp.ge.s32.totalorder %s28, 1
      %s30 = scalar_select %p29, 0, %s28
      %s31 = sadd.s32 1, %s20
      %s32 = scalar_select %p29, %s31, %s20
      %p33 = scmp.ge.s32.totalorder %s32, 1
      %s34 = scalar_select %p33, 0, %s32
      %s35 = sadd.s32 1, %s19
      %s36 = scalar_select %p33, %s35, %s19
      %p37 = scmp.ge.s32.totalorder %s36, 2
      %s38 = scalar_select %p37, 0, %s36
      %s39 = ssub.s32 %s19, %s38
      %s40 = ssub.s32 %s20, %s34
      %s41 = sor.u32 %s39, %s40
      %p42 = scmp.eq.s32.totalorder %s41, 0
      %s44 = sadd.s32 %s43, 1
      %s45 = scalar_select %p42, %s43, %s44
      %p48 = pneg %p42
      %p49 = scmp.eq.s32.totalorder %s12, 1
      %p50 = por %p48, %p49
      %p51 = scmp.ne.s32.totalorder %s43, %s46
      %p52 = scmp.eq.s32.totalorder %s12, 0
      %p53 = por %p51, %p52
      %p54 = scmp.ne.s32.totalorder %s43, %s46
      %p55 = scmp.eq.s32.totalorder %s17, 1
      %p56 = por %p54, %p55
      %p57 = scmp.ne.s32.totalorder %s46, %s47
      %p58 = scmp.eq.s32.totalorder %s17, 0
      %p59 = por %p57, %p58
      %p60 = scmp.ne.s32.totalorder %s46, %s47
      %p61 = scmp.eq.s32.totalorder %s18, 1
      %p62 = por %p60, %p61
      %p64 = scmp.ne.s32.totalorder %s47, %s63
      %p65 = scmp.eq.s32.totalorder %s18, 0
      %p66 = por %p64, %p65
      %s67 = ssub.s32 %s19, %s38
      %s68 = ssub.s32 %s21, %s30
      %s69 = sor.u32 %s67, %s68
      %p70 = scmp.eq.s32.totalorder %s69, 0
      %s72 = sadd.s32 %s71, 1
      %s73 = scalar_select %p70, %s71, %s72
      %p76 = pneg %p70
      %p77 = scmp.eq.s32.totalorder %s12, 1
      %p78 = por %p76, %p77
      %p79 = scmp.ne.s32.totalorder %s71, %s74
      %p80 = scmp.eq.s32.totalorder %s12, 0
      %p81 = por %p79, %p80
      %p82 = scmp.ne.s32.totalorder %s71, %s74
      %p83 = scmp.eq.s32.totalorder %s17, 1
      %p84 = por %p82, %p83
      %p85 = scmp.ne.s32.totalorder %s74, %s75
      %p86 = scmp.eq.s32.totalorder %s17, 0
      %p87 = por %p85, %p86
      %p88 = scmp.ne.s32.totalorder %s74, %s75
      %p89 = scmp.eq.s32.totalorder %s18, 1
      %p90 = por %p88, %p89
      %p92 = scmp.ne.s32.totalorder %s75, %s91
      %p93 = scmp.eq.s32.totalorder %s18, 0
      %p94 = por %p92, %p93
      %s95 = ssub.s32 %s19, %s38
      %s96 = ssub.s32 %s21, %s30
      %s97 = sor.u32 %s95, %s96
      %p98 = scmp.eq.s32.totalorder %s97, 0
      %s100 = sadd.s32 %s99, 1
      %s101 = scalar_select %p98, %s99, %s100
      %p104 = pneg %p98
      %p105 = scmp.eq.s32.totalorder %s12, 1
      %p106 = por %p104, %p105
      %p107 = scmp.ne.s32.totalorder %s99, %s102
      %p108 = scmp.eq.s32.totalorder %s12, 0
      %p109 = por %p107, %p108
      %p110 = scmp.ne.s32.totalorder %s99, %s102
      %p111 = scmp.eq.s32.totalorder %s17, 1
      %p112 = por %p110, %p111
      %p113 = scmp.ne.s32.totalorder %s102, %s103
      %p114 = scmp.eq.s32.totalorder %s17, 0
      %p115 = por %p113, %p114
      %p116 = scmp.ne.s32.totalorder %s102, %s103
      %p117 = scmp.eq.s32.totalorder %s18, 1
      %p118 = por %p116, %p117
      %p120 = scmp.ne.s32.totalorder %s103, %s119
      %p121 = scmp.eq.s32.totalorder %s18, 0
      %p122 = por %p120, %p121
      %s123 = ssub.s32 %s19, %s38
      %s124 = ssub.s32 %s20, %s34
      %s125 = sor.u32 %s123, %s124
      %p126 = scmp.eq.s32.totalorder %s125, 0
      %s128 = sadd.s32 %s127, 1
      %s129 = scalar_select %p126, %s127, %s128
      %p132 = pneg %p126
      %p133 = scmp.eq.s32.totalorder %s12, 1
      %p134 = por %p132, %p133
      %p135 = scmp.ne.s32.totalorder %s127, %s130
      %p136 = scmp.eq.s32.totalorder %s12, 0
      %p137 = por %p135, %p136
      %p138 = scmp.ne.s32.totalorder %s127, %s130
      %p139 = scmp.eq.s32.totalorder %s17, 1
      %p140 = por %p138, %p139
      %p141 = scmp.ne.s32.totalorder %s130, %s131
      %p142 = scmp.eq.s32.totalorder %s17, 0
      %p143 = por %p141, %p142
      %p144 = scmp.ne.s32.totalorder %s130, %s131
      %p145 = scmp.eq.s32.totalorder %s18, 1
      %p146 = por %p144, %p145
      %p148 = scmp.ne.s32.totalorder %s131, %s147
      %p149 = scmp.eq.s32.totalorder %s18, 0
      %p150 = por %p148, %p149
      %p151 = scmp.le.s32.totalorder 1, %s12
      %p152 = scmp.lt.s32.totalorder %s12, 3
      %p153 = pnand %p151, %p152
      %p154 = pneg %p153
      // Predicated region
      $region9: #{multi_attention.3} parent=5 // pred_check
        _
      $region10: #{multi_attention.3} parent=5 // pred_check_branch
        %156 = sbr.rel (%p153) target = $region12
      $region11: #{multi_attention.3} parent=5 // pred_region
        %s157 = ssub.s32 %s12, 1
      $region12: #{multi_attention.3} parent=5 // pred_fallthru
        _
      %p158 = scmp.lt.s32.totalorder %s12, 2
      // Predicated region
      $region13: #{multi_attention.3} parent=5 // pred_check
        %p159 = pneg %p158
      $region14: #{multi_attention.3} parent=5 // pred_check_branch
        %161 = sbr.rel (%p159) target = $region16
      $region15: #{multi_attention.3} parent=5 // pred_region
        // Predicated region
        $region17: #{multi_attention.3} parent=15 // pred_check
          %p162 = pneg %p53
        $region18: #{multi_attention.3} parent=15 // pred_check_branch
          %164 = sbr.rel (%p162) target = $region20
        $region19: #{multi_attention.3} parent=15 // pred_region
          %p165 = scmp.lt.s32.totalorder %s19, 1
          %s166 = scalar_select %p165, %s19, 1
          %p167 = scmp.lt.s32.totalorder %s20, 0
          %s168 = scalar_select %p167, %s20, 0
          %s169 = smul.addr %s166, 4
          %s170 = sadd.s32 %s168, %s169
          %s171 = smul.addr %s170, 4
          %s172 = scalar_lea.vmem %s0, %s171
        $region20: #{multi_attention.3} parent=15 // pred_fallthru
          _
        // Predicated region
        $region21: #{multi_attention.3} parent=15 // pred_check
          %p173 = pneg %p81
        $region22: #{multi_attention.3} parent=15 // pred_check_branch
          %175 = sbr.rel (%p173) target = $region24
        $region23: #{multi_attention.3} parent=15 // pred_region
          %p176 = scmp.lt.s32.totalorder %s19, 1
          %s177 = scalar_select %p176, %s19, 1
          %p178 = scmp.lt.s32.totalorder %s21, 0
          %s179 = scalar_select %p178, %s21, 0
          %s180 = smul.addr %s177, 4
          %s181 = sadd.s32 %s179, %s180
          %s182 = smul.addr %s181, 4
          %s183 = scalar_lea.vmem %s1, %s182
        $region24: #{multi_attention.3} parent=15 // pred_fallthru
          _
        // Predicated region
        $region25: #{multi_attention.3} parent=15 // pred_check
          %p184 = pneg %p109
        $region26: #{multi_attention.3} parent=15 // pred_check_branch
          %186 = sbr.rel (%p184) target = $region28
        $region27: #{multi_attention.3} parent=15 // pred_region
          %p187 = scmp.lt.s32.totalorder %s19, 1
          %s188 = scalar_select %p187, %s19, 1
          %p189 = scmp.lt.s32.totalorder %s21, 0
          %s190 = scalar_select %p189, %s21, 0
          %s191 = smul.addr %s188, 4
          %s192 = sadd.s32 %s190, %s191
          %s193 = smul.addr %s192, 4
          %s194 = scalar_lea.vmem %s2, %s193
        $region28: #{multi_attention.3} parent=15 // pred_fallthru
          _
      $region16: #{multi_attention.3} parent=5 // pred_fallthru
        _
      %p195 = scmp.le.s32.totalorder 1, %s12
      %p196 = scmp.lt.s32.totalorder %s12, 3
      %p197 = pnand %p195, %p196
      %p198 = pneg %p197
      // Predicated region
      $region29: #{multi_attention.3} parent=5 // pred_check
        _
      $region30: #{multi_attention.3} parent=5 // pred_check_branch
        %200 = sbr.rel (%p197) target = $region32
      $region31: #{multi_attention.3} parent=5 // pred_region
        %s201 = ssub.s32 %s12, 1
        %p202 = scmp.lt.s32.totalorder %s22, 1
        %s203 = scalar_select %p202, %s22, 1
        %p204 = scmp.lt.s32.totalorder %s23, 0
        %s205 = scalar_select %p204, %s23, 0
        %s206 = smul.addr %s203, 4
        %s207 = sadd.s32 %s205, %s206
        %s208 = smul.addr %s207, 4
        %s209 = scalar_lea.vmem %s0, %s208
        %p210 = pneg %p59
        %p211 = pneg %p56
        %p212 = scmp.lt.s32.totalorder %s22, 1
        %s213 = scalar_select %p212, %s22, 1
        %p214 = scmp.lt.s32.totalorder %s24, 0
        %s215 = scalar_select %p214, %s24, 0
        %s216 = smul.addr %s213, 4
        %s217 = sadd.s32 %s215, %s216
        %s218 = smul.addr %s217, 4
        %s219 = scalar_lea.vmem %s1, %s218
        %p220 = pneg %p87
        %p221 = pneg %p84
        %p222 = scmp.lt.s32.totalorder %s22, 1
        %s223 = scalar_select %p222, %s22, 1
        %p224 = scmp.lt.s32.totalorder %s24, 0
        %s225 = scalar_select %p224, %s24, 0
        %s226 = smul.addr %s223, 4
        %s227 = sadd.s32 %s225, %s226
        %s228 = smul.addr %s227, 4
        %s229 = scalar_lea.vmem %s2, %s228
        %p230 = pneg %p115
        %p231 = pneg %p112
        %p232 = pneg %p143
        %p233 = pneg %p140
        %s234 = sand.u32 %s130, 1
        %s235 = scalar_lea.sflag [#allocation6], %s234
        %s236 = sand.u32 %s130, 1
        %s237 = smul.addr %s236, 8
        %s238 = scalar_lea.vmem [#allocation5], %s237
        %p239 = scmp.lt.s32.totalorder %s22, 1
        %s240 = scalar_select %p239, %s22, 1
        %p241 = scmp.lt.s32.totalorder %s23, 0
        %s242 = scalar_select %p241, %s23, 0
        %s243 = smul.addr %s240, 4
        %s244 = sadd.s32 %s242, %s243
        %s245 = smul.addr %s244, 4
        %s246 = scalar_lea.vmem %s0, %s245
        %p247 = scmp.lt.s32.totalorder %s22, 1
        %s248 = scalar_select %p247, %s22, 1
        %p249 = scmp.lt.s32.totalorder %s24, 0
        %s250 = scalar_select %p249, %s24, 0
        %s251 = smul.addr %s248, 4
        %s252 = sadd.s32 %s250, %s251
        %s253 = smul.addr %s252, 4
        %s254 = scalar_lea.vmem %s1, %s253
        %p255 = scmp.lt.s32.totalorder %s22, 1
        %s256 = scalar_select %p255, %s22, 1
        %p257 = scmp.lt.s32.totalorder %s24, 0
        %s258 = scalar_select %p257, %s24, 0
        %s259 = smul.addr %s256, 4
        %s260 = sadd.s32 %s258, %s259
        %s261 = smul.addr %s260, 4
        %s262 = scalar_lea.vmem %s2, %s261
        %p264 = scmp.eq.s32.totalorder %s24, 0
        // Predicated region
        $region33: #{multi_attention.3} parent=31 // pred_check
          %p265 = pneg %p264
        $region34: #{multi_attention.3} parent=31 // pred_check_branch
          %267 = sbr.rel (%p265) target = $region36
        $region35: #{multi_attention.3} parent=31 // pred_region
          %vm268 = vcmask 7168
          %269 = vst.msk [vmem:[#allocation2] sm:$0xff] %vm268, -inf
          %270 = vst.msk [vmem:[#allocation2 + $0x8] sm:$0xff] %vm268, -inf
          %271 = vst.msk [vmem:[#allocation2 + $0x10] sm:$0xff] %vm268, -inf
          %272 = vst.msk [vmem:[#allocation2 + $0x18] sm:$0xff] %vm268, -inf
          %273 = vst.msk [vmem:[#allocation3] sm:$0xff] %vm268, 0.0
          %274 = vst.msk [vmem:[#allocation3 + $0x8] sm:$0xff] %vm268, 0.0
          %275 = vst.msk [vmem:[#allocation3 + $0x10] sm:$0xff] %vm268, 0.0
          %276 = vst.msk [vmem:[#allocation3 + $0x18] sm:$0xff] %vm268, 0.0
          %vm277 = vcmask 64512
          %278 = vst.msk [vmem:[#allocation4] sm:$0xff] %vm277, 0.0
          %279 = vst.msk [vmem:[#allocation4 + $0x8] sm:$0xff] %vm277, 0.0
          %280 = vst.msk [vmem:[#allocation4 + $0x10] sm:$0xff] %vm277, 0.0
          %281 = vst.msk [vmem:[#allocation4 + $0x18] sm:$0xff] %vm277, 0.0
        $region36: #{multi_attention.3} parent=31 // pred_fallthru
          _
        %v282 = vld [vmem:[%s246] sm:$0xf]
        %v283 = vld [vmem:[%s246 + $0x4] sm:$0xf]
        %v284 = vld [vmem:[%s246 + $0x8] sm:$0xf]
        %v285 = vld [vmem:[%s246 + $0xc] sm:$0xf]
        %v286 = vld [vmem:[%s254] sm:$0xf]
        %v287 = vld [vmem:[%s254 + $0x4] sm:$0xf]
        %v288 = vld [vmem:[%s254 + $0x8] sm:$0xf]
        %v289 = vld [vmem:[%s254 + $0xc] sm:$0xf]
        %v290 = vld [vmem:[%s262] sm:$0xf]
        %v291 = vld [vmem:[%s262 + $0x4] sm:$0xf]
        %v292 = vld [vmem:[%s262 + $0x8] sm:$0xf]
        %v293 = vld [vmem:[%s262 + $0xc] sm:$0xf]
        %vm294 = vcmask 64512
        %v296 = vsel %vm294, %v282, 0
        %v299 = vsel %vm294, %v286, 0
        %301 = vmatprep.subr.bf16.mxu0 0
        %302 = vmatpush1.bf16.xpose.msra.mxu0 %v299
        %303 = vmatprep.subr.bf16.mxu0 0
        %304 = vmatpush1.bf16.xpose.msra.mxu0 0
        %305 = vmatprep.subr.bf16.mxu0 0
        %306 = vmatpush1.bf16.xpose.msra.mxu0 0
        %307 = vmatprep.subr.bf16.mxu0 0
        %308 = vmatpush1.bf16.xpose.msra.mxu0 0
        %309 = vmatprep.subr.bf16.mxu0 0
        %310 = vmatpush1.bf16.xpose.msra.mxu0 0
        %311 = vmatprep.subr.bf16.mxu0 0
        %312 = vmatpush1.bf16.xpose.msra.mxu0 0
        %313 = vmatprep.subr.bf16.mxu0 0
        %314 = vmatpush1.bf16.xpose.msra.mxu0 0
        %315 = vmatprep.subr.bf16.mxu0 0
        %316 = vmatpush1.bf16.xpose.msra.mxu0 0
        %317 = vmatprep.subr.bf16.mxu0 0
        %318 = vmatpush1.bf16.xpose.msra.mxu0 0
        %319 = vmatprep.subr.bf16.mxu0 0
        %320 = vmatpush1.bf16.xpose.msra.mxu0 0
        %321 = vmatprep.subr.bf16.mxu0 0
        %322 = vmatpush1.bf16.xpose.msra.mxu0 0
        %323 = vmatprep.subr.bf16.mxu0 0
        %324 = vmatpush1.bf16.xpose.msra.mxu0 0
        %325 = vmatprep.subr.bf16.mxu0 0
        %326 = vmatpush1.bf16.xpose.msra.mxu0 0
        %327 = vmatprep.subr.bf16.mxu0 0
        %328 = vmatpush1.bf16.xpose.msra.mxu0 0
        %329 = vmatprep.subr.bf16.mxu0 0
        %330 = vmatpush1.bf16.xpose.msra.mxu0 0
        %331 = vmatprep.subr.bf16.mxu0 0
        %332 = vmatpush1.bf16.xpose.msra.mxu0 0
        %333 = vmatprep.mubr.bf16.mxu0 0
        %334 = vmatmul.mubr.bf16.gmra.mrb[0].mxu0 %v296
        %v335 = vpop.f32.mrb[0].mxu0
        %v336 = vadd.f32 0.0, %v335
        %v337 = vpop.f32.mrb[0].mxu0
        %v338 = vpop.f32.mrb[0].mxu0
        %v339 = vpop.f32.mrb[0].mxu0
        %340 = vdwg.mxu0
        %v342 = vsel %vm294, %v283, 0
        %v345 = vsel %vm294, %v287, 0
        %347 = vmatprep.subr.bf16.mxu0 0
        %348 = vmatpush1.bf16.xpose.msra.mxu0 %v345
        %349 = vmatprep.subr.bf16.mxu0 0
        %350 = vmatpush1.bf16.xpose.msra.mxu0 0
        %351 = vmatprep.subr.bf16.mxu0 0
        %352 = vmatpush1.bf16.xpose.msra.mxu0 0
        %353 = vmatprep.subr.bf16.mxu0 0
        %354 = vmatpush1.bf16.xpose.msra.mxu0 0
        %355 = vmatprep.subr.bf16.mxu0 0
        %356 = vmatpush1.bf16.xpose.msra.mxu0 0
        %357 = vmatprep.subr.bf16.mxu0 0
        %358 = vmatpush1.bf16.xpose.msra.mxu0 0
        %359 = vmatprep.subr.bf16.mxu0 0
        %360 = vmatpush1.bf16.xpose.msra.mxu0 0
        %361 = vmatprep.subr.bf16.mxu0 0
        %362 = vmatpush1.bf16.xpose.msra.mxu0 0
        %363 = vmatprep.subr.bf16.mxu0 0
        %364 = vmatpush1.bf16.xpose.msra.mxu0 0
        %365 = vmatprep.subr.bf16.mxu0 0
        %366 = vmatpush1.bf16.xpose.msra.mxu0 0
        %367 = vmatprep.subr.bf16.mxu0 0
        %368 = vmatpush1.bf16.xpose.msra.mxu0 0
        %369 = vmatprep.subr.bf16.mxu0 0
        %370 = vmatpush1.bf16.xpose.msra.mxu0 0
        %371 = vmatprep.subr.bf16.mxu0 0
        %372 = vmatpush1.bf16.xpose.msra.mxu0 0
        %373 = vmatprep.subr.bf16.mxu0 0
        %374 = vmatpush1.bf16.xpose.msra.mxu0 0
        %375 = vmatprep.subr.bf16.mxu0 0
        %376 = vmatpush1.bf16.xpose.msra.mxu0 0
        %377 = vmatprep.subr.bf16.mxu0 0
        %378 = vmatpush1.bf16.xpose.msra.mxu0 0
        %379 = vmatprep.mubr.bf16.mxu0 0
        %380 = vmatmul.mubr.bf16.gmra.mrb[0].mxu0 %v342
        %v381 = vpop.f32.mrb[0].mxu0
        %v382 = vadd.f32 0.0, %v381
        %v383 = vpop.f32.mrb[0].mxu0
        %v384 = vpop.f32.mrb[0].mxu0
        %v385 = vpop.f32.mrb[0].mxu0
        %386 = vdwg.mxu0
        %v388 = vsel %vm294, %v284, 0
        %v391 = vsel %vm294, %v288, 0
        %393 = vmatprep.subr.bf16.mxu0 0
        %394 = vmatpush1.bf16.xpose.msra.mxu0 %v391
        %395 = vmatprep.subr.bf16.mxu0 0
        %396 = vmatpush1.bf16.xpose.msra.mxu0 0
        %397 = vmatprep.subr.bf16.mxu0 0
        %398 = vmatpush1.bf16.xpose.msra.mxu0 0
        %399 = vmatprep.subr.bf16.mxu0 0
        %400 = vmatpush1.bf16.xpose.msra.mxu0 0
        %401 = vmatprep.subr.bf16.mxu0 0
        %402 = vmatpush1.bf16.xpose.msra.mxu0 0
        %403 = vmatprep.subr.bf16.mxu0 0
        %404 = vmatpush1.bf16.xpose.msra.mxu0 0
        %405 = vmatprep.subr.bf16.mxu0 0
        %406 = vmatpush1.bf16.xpose.msra.mxu0 0
        %407 = vmatprep.subr.bf16.mxu0 0
        %408 = vmatpush1.bf16.xpose.msra.mxu0 0
        %409 = vmatprep.subr.bf16.mxu0 0
        %410 = vmatpush1.bf16.xpose.msra.mxu0 0
        %411 = vmatprep.subr.bf16.mxu0 0
        %412 = vmatpush1.bf16.xpose.msra.mxu0 0
        %413 = vmatprep.subr.bf16.mxu0 0
        %414 = vmatpush1.bf16.xpose.msra.mxu0 0
        %415 = vmatprep.subr.bf16.mxu0 0
        %416 = vmatpush1.bf16.xpose.msra.mxu0 0
        %417 = vmatprep.subr.bf16.mxu0 0
        %418 = vmatpush1.bf16.xpose.msra.mxu0 0
        %419 = vmatprep.subr.bf16.mxu0 0
        %420 = vmatpush1.bf16.xpose.msra.mxu0 0
        %421 = vmatprep.subr.bf16.mxu0 0
        %422 = vmatpush1.bf16.xpose.msra.mxu0 0
        %423 = vmatprep.subr.bf16.mxu0 0
        %424 = vmatpush1.bf16.xpose.msra.mxu0 0
        %425 = vmatprep.mubr.bf16.mxu0 0
        %426 = vmatmul.mubr.bf16.gmra.mrb[0].mxu0 %v388
        %v427 = vpop.f32.mrb[0].mxu0
        %v428 = vadd.f32 0.0, %v427
        %v429 = vpop.f32.mrb[0].mxu0
        %v430 = vpop.f32.mrb[0].mxu0
        %v431 = vpop.f32.mrb[0].mxu0
        %432 = vdwg.mxu0
        %v434 = vsel %vm294, %v285, 0
        %v437 = vsel %vm294, %v289, 0
        %439 = vmatprep.subr.bf16.mxu0 0
        %440 = vmatpush1.bf16.xpose.msra.mxu0 %v437
        %441 = vmatprep.subr.bf16.mxu0 0
        %442 = vmatpush1.bf16.xpose.msra.mxu0 0
        %443 = vmatprep.subr.bf16.mxu0 0
        %444 = vmatpush1.bf16.xpose.msra.mxu0 0
        %445 = vmatprep.subr.bf16.mxu0 0
        %446 = vmatpush1.bf16.xpose.msra.mxu0 0
        %447 = vmatprep.subr.bf16.mxu0 0
        %448 = vmatpush1.bf16.xpose.msra.mxu0 0
        %449 = vmatprep.subr.bf16.mxu0 0
        %450 = vmatpush1.bf16.xpose.msra.mxu0 0
        %451 = vmatprep.subr.bf16.mxu0 0
        %452 = vmatpush1.bf16.xpose.msra.mxu0 0
        %453 = vmatprep.subr.bf16.mxu0 0
        %454 = vmatpush1.bf16.xpose.msra.mxu0 0
        %455 = vmatprep.subr.bf16.mxu0 0
        %456 = vmatpush1.bf16.xpose.msra.mxu0 0
        %457 = vmatprep.subr.bf16.mxu0 0
        %458 = vmatpush1.bf16.xpose.msra.mxu0 0
        %459 = vmatprep.subr.bf16.mxu0 0
        %460 = vmatpush1.bf16.xpose.msra.mxu0 0
        %461 = vmatprep.subr.bf16.mxu0 0
        %462 = vmatpush1.bf16.xpose.msra.mxu0 0
        %463 = vmatprep.subr.bf16.mxu0 0
        %464 = vmatpush1.bf16.xpose.msra.mxu0 0
        %465 = vmatprep.subr.bf16.mxu0 0
        %466 = vmatpush1.bf16.xpose.msra.mxu0 0
        %467 = vmatprep.subr.bf16.mxu0 0
        %468 = vmatpush1.bf16.xpose.msra.mxu0 0
        %469 = vmatprep.subr.bf16.mxu0 0
        %470 = vmatpush1.bf16.xpose.msra.mxu0 0
        %471 = vmatprep.mubr.bf16.mxu0 0
        %472 = vmatmul.mubr.bf16.gmra.mrb[0].mxu0 %v434
        %v473 = vpop.f32.mrb[0].mxu0
        %v474 = vadd.f32 0.0, %v473
        %v475 = vpop.f32.mrb[0].mxu0
        %v476 = vpop.f32.mrb[0].mxu0
        %v477 = vpop.f32.mrb[0].mxu0
        %478 = vdwg.mxu0
        %v479 = vld [vmem:[#allocation2] sm:$0xff]
        %v480 = vld [vmem:[#allocation2 + $0x8] sm:$0xff]
        %v481 = vld [vmem:[#allocation2 + $0x10] sm:$0xff]
        %v482 = vld [vmem:[#allocation2 + $0x18] sm:$0xff]
        %v483 = vsel %vm294, %v336, -inf
        %484 = vmax.xlane.f32.xlu0 %v483
        %v485 = vpop.xlane.xlu0 %484
        %v486 = vsel %vm294, %v382, -inf
        %487 = vmax.xlane.f32.xlu0 %v486
        %v488 = vpop.xlane.xlu0 %487
        %v489 = vsel %vm294, %v428, -inf
        %490 = vmax.xlane.f32.xlu0 %v489
        %v491 = vpop.xlane.xlu0 %490
        %v492 = vsel %vm294, %v474, -inf
        %493 = vmax.xlane.f32.xlu0 %v492
        %v494 = vpop.xlane.xlu0 %493
        %v495 = vmax.f32 %v479, %v485
        %v496 = vmax.f32 %v480, %v488
        %v497 = vmax.f32 %v481, %v491
        %v498 = vmax.f32 %v482, %v494
        %v499 = vsub.f32 %v479, %v495
        %v500 = vsub.f32 %v480, %v496
        %v501 = vsub.f32 %v481, %v497
        %v502 = vsub.f32 %v482, %v498
        %v503 = vmul.f32 %v499, 1.442695
        %v504 = vpow.pop %v503
        %v505 = vmul.f32 %v500, 1.442695
        %v506 = vpow.pop %v505
        %v507 = vmul.f32 %v501, 1.442695
        %v508 = vpow.pop %v507
        %v509 = vmul.f32 %v502, 1.442695
        %v510 = vpow.pop %v509
        %512 = vset.pattern.permute.xlu0 0
        %513 = vperm.xlu0 %512, %v495
        %v514 = vpop.permute.xlu0 %513
        %517 = vset.pattern.permute.xlu0 0
        %518 = vperm.xlu0 %517, %v496
        %v519 = vpop.permute.xlu0 %518
        %522 = vset.pattern.permute.xlu0 0
        %523 = vperm.xlu0 %522, %v497
        %v524 = vpop.permute.xlu0 %523
        %527 = vset.pattern.permute.xlu0 0
        %528 = vperm.xlu0 %527, %v498
        %v529 = vpop.permute.xlu0 %528
        %v531 = vsub.f32 %v336, %v514
        %v532 = vsub.f32 %v382, %v519
        %v533 = vsub.f32 %v428, %v524
        %v534 = vsub.f32 %v474, %v529
        %v535 = vmul.f32 %v531, 1.442695
        %v536 = vpow.pop %v535
        %v537 = vmul.f32 %v532, 1.442695
        %v538 = vpow.pop %v537
        %v539 = vmul.f32 %v533, 1.442695
        %v540 = vpow.pop %v539
        %v541 = vmul.f32 %v534, 1.442695
        %v542 = vpow.pop %v541
        %v543 = vld [vmem:[#allocation3] sm:$0xff]
        %v544 = vld [vmem:[#allocation3 + $0x8] sm:$0xff]
        %v545 = vld [vmem:[#allocation3 + $0x10] sm:$0xff]
        %v546 = vld [vmem:[#allocation3 + $0x18] sm:$0xff]
        %v547 = vmul.f32 %v504, %v543
        %v548 = vmul.f32 %v506, %v544
        %v549 = vmul.f32 %v508, %v545
        %v550 = vmul.f32 %v510, %v546
        %v551 = vsel %vm294, %v536, 0.0
        %552 = vadd.xlane.f32.xlu0 %v551
        %v553 = vpop.xlane.xlu0 %552
        %v554 = vsel %vm294, %v538, 0.0
        %555 = vadd.xlane.f32.xlu0 %v554
        %v556 = vpop.xlane.xlu0 %555
        %v557 = vsel %vm294, %v540, 0.0
        %558 = vadd.xlane.f32.xlu0 %v557
        %v559 = vpop.xlane.xlu0 %558
        %v560 = vsel %vm294, %v542, 0.0
        %561 = vadd.xlane.f32.xlu0 %v560
        %v562 = vpop.xlane.xlu0 %561
        %v563 = vadd.f32 %v547, %v553
        %v564 = vadd.f32 %v548, %v556
        %v565 = vadd.f32 %v549, %v559
        %v566 = vadd.f32 %v550, %v562
        %vm567 = vcmask 7168
        %568 = vst.msk [vmem:[#allocation3] sm:$0xff] %vm567, %v563
        %569 = vst.msk [vmem:[#allocation3 + $0x8] sm:$0xff] %vm567, %v564
        %570 = vst.msk [vmem:[#allocation3 + $0x10] sm:$0xff] %vm567, %v565
        %571 = vst.msk [vmem:[#allocation3 + $0x18] sm:$0xff] %vm567, %v566
        %v572 = vld [vmem:[#allocation4] sm:$0xff]
        %v573 = vld [vmem:[#allocation4 + $0x8] sm:$0xff]
        %v574 = vld [vmem:[#allocation4 + $0x10] sm:$0xff]
        %v575 = vld [vmem:[#allocation4 + $0x18] sm:$0xff]
        %577 = vset.pattern.permute.xlu0 0
        %578 = vperm.xlu0 %577, %v504
        %v579 = vpop.permute.xlu0 %578
        %582 = vset.pattern.permute.xlu0 0
        %583 = vperm.xlu0 %582, %v506
        %v584 = vpop.permute.xlu0 %583
        %587 = vset.pattern.permute.xlu0 0
        %588 = vperm.xlu0 %587, %v508
        %v589 = vpop.permute.xlu0 %588
        %592 = vset.pattern.permute.xlu0 0
        %593 = vperm.xlu0 %592, %v510
        %v594 = vpop.permute.xlu0 %593
        %v596 = vmul.f32 %v579, %v572
        %v597 = vmul.f32 %v584, %v573
        %v598 = vmul.f32 %v589, %v574
        %v599 = vmul.f32 %v594, %v575
        %v600 = vpack.c.bf16 %v536, %v536
        %v601 = vpack.c.bf16 %v538, %v538
        %v602 = vpack.c.bf16 %v540, %v540
        %v603 = vpack.c.bf16 %v542, %v542
        %v605 = vsel %vm294, %v600, 0
        %vm607 = vcmask 1043456
        %v609 = vsel %vm607, %v290, 0
        %611 = vmatprep.subr.bf16.mxu0 0
        %612 = vmatpush1.bf16.msra.mxu0 %v609
        %613 = vmatprep.subr.bf16.mxu0 0
        %614 = vmatpush1.bf16.msra.mxu0 0
        %615 = vmatprep.subr.bf16.mxu0 0
        %616 = vmatpush1.bf16.msra.mxu0 0
        %617 = vmatprep.subr.bf16.mxu0 0
        %618 = vmatpush1.bf16.msra.mxu0 0
        %619 = vmatprep.subr.bf16.mxu0 0
        %620 = vmatpush1.bf16.msra.mxu0 0
        %621 = vmatprep.subr.bf16.mxu0 0
        %622 = vmatpush1.bf16.msra.mxu0 0
        %623 = vmatprep.subr.bf16.mxu0 0
        %624 = vmatpush1.bf16.msra.mxu0 0
        %625 = vmatprep.subr.bf16.mxu0 0
        %626 = vmatpush1.bf16.msra.mxu0 0
        %627 = vmatprep.subr.bf16.mxu0 0
        %628 = vmatpush1.bf16.msra.mxu0 0
        %629 = vmatprep.subr.bf16.mxu0 0
        %630 = vmatpush1.bf16.msra.mxu0 0
        %631 = vmatprep.subr.bf16.mxu0 0
        %632 = vmatpush1.bf16.msra.mxu0 0
        %633 = vmatprep.subr.bf16.mxu0 0
        %634 = vmatpush1.bf16.msra.mxu0 0
        %635 = vmatprep.subr.bf16.mxu0 0
        %636 = vmatpush1.bf16.msra.mxu0 0
        %637 = vmatprep.subr.bf16.mxu0 0
        %638 = vmatpush1.bf16.msra.mxu0 0
        %639 = vmatprep.subr.bf16.mxu0 0
        %640 = vmatpush1.bf16.msra.mxu0 0
        %641 = vmatprep.subr.bf16.mxu0 0
        %642 = vmatpush1.bf16.msra.mxu0 0
        %643 = vmatprep.mubr.bf16.mxu0 0
        %644 = vmatmul.mubr.bf16.gmra.mrb[0].mxu0 %v605
        %v645 = vpop.f32.mrb[0].mxu0
        %v646 = vadd.f32 0.0, %v645
        %v647 = vpop.f32.mrb[0].mxu0
        %v648 = vpop.f32.mrb[0].mxu0
        %v649 = vpop.f32.mrb[0].mxu0
        %650 = vdwg.mxu0
        %v652 = vsel %vm294, %v601, 0
        %v655 = vsel %vm607, %v291, 0
        %657 = vmatprep.subr.bf16.mxu0 0
        %658 = vmatpush1.bf16.msra.mxu0 %v655
        %659 = vmatprep.subr.bf16.mxu0 0
        %660 = vmatpush1.bf16.msra.mxu0 0
        %661 = vmatprep.subr.bf16.mxu0 0
        %662 = vmatpush1.bf16.msra.mxu0 0
        %663 = vmatprep.subr.bf16.mxu0 0
        %664 = vmatpush1.bf16.msra.mxu0 0
        %665 = vmatprep.subr.bf16.mxu0 0
        %666 = vmatpush1.bf16.msra.mxu0 0
        %667 = vmatprep.subr.bf16.mxu0 0
        %668 = vmatpush1.bf16.msra.mxu0 0
        %669 = vmatprep.subr.bf16.mxu0 0
        %670 = vmatpush1.bf16.msra.mxu0 0
        %671 = vmatprep.subr.bf16.mxu0 0
        %672 = vmatpush1.bf16.msra.mxu0 0
        %673 = vmatprep.subr.bf16.mxu0 0
        %674 = vmatpush1.bf16.msra.mxu0 0
        %675 = vmatprep.subr.bf16.mxu0 0
        %676 = vmatpush1.bf16.msra.mxu0 0
        %677 = vmatprep.subr.bf16.mxu0 0
        %678 = vmatpush1.bf16.msra.mxu0 0
        %679 = vmatprep.subr.bf16.mxu0 0
        %680 = vmatpush1.bf16.msra.mxu0 0
        %681 = vmatprep.subr.bf16.mxu0 0
        %682 = vmatpush1.bf16.msra.mxu0 0
        %683 = vmatprep.subr.bf16.mxu0 0
        %684 = vmatpush1.bf16.msra.mxu0 0
        %685 = vmatprep.subr.bf16.mxu0 0
        %686 = vmatpush1.bf16.msra.mxu0 0
        %687 = vmatprep.subr.bf16.mxu0 0
        %688 = vmatpush1.bf16.msra.mxu0 0
        %689 = vmatprep.mubr.bf16.mxu0 0
        %690 = vmatmul.mubr.bf16.gmra.mrb[0].mxu0 %v652
        %v691 = vpop.f32.mrb[0].mxu0
        %v692 = vadd.f32 0.0, %v691
        %v693 = vpop.f32.mrb[0].mxu0
        %v694 = vpop.f32.mrb[0].mxu0
        %v695 = vpop.f32.mrb[0].mxu0
        %696 = vdwg.mxu0
        %v698 = vsel %vm294, %v602, 0
        %v701 = vsel %vm607, %v292, 0
        %703 = vmatprep.subr.bf16.mxu0 0
        %704 = vmatpush1.bf16.msra.mxu0 %v701
        %705 = vmatprep.subr.bf16.mxu0 0
        %706 = vmatpush1.bf16.msra.mxu0 0
        %707 = vmatprep.subr.bf16.mxu0 0
        %708 = vmatpush1.bf16.msra.mxu0 0
        %709 = vmatprep.subr.bf16.mxu0 0
        %710 = vmatpush1.bf16.msra.mxu0 0
        %711 = vmatprep.subr.bf16.mxu0 0
        %712 = vmatpush1.bf16.msra.mxu0 0
        %713 = vmatprep.subr.bf16.mxu0 0
        %714 = vmatpush1.bf16.msra.mxu0 0
        %715 = vmatprep.subr.bf16.mxu0 0
        %716 = vmatpush1.bf16.msra.mxu0 0
        %717 = vmatprep.subr.bf16.mxu0 0
        %718 = vmatpush1.bf16.msra.mxu0 0
        %719 = vmatprep.subr.bf16.mxu0 0
        %720 = vmatpush1.bf16.msra.mxu0 0
        %721 = vmatprep.subr.bf16.mxu0 0
        %722 = vmatpush1.bf16.msra.mxu0 0
        %723 = vmatprep.subr.bf16.mxu0 0
        %724 = vmatpush1.bf16.msra.mxu0 0
        %725 = vmatprep.subr.bf16.mxu0 0
        %726 = vmatpush1.bf16.msra.mxu0 0
        %727 = vmatprep.subr.bf16.mxu0 0
        %728 = vmatpush1.bf16.msra.mxu0 0
        %729 = vmatprep.subr.bf16.mxu0 0
        %730 = vmatpush1.bf16.msra.mxu0 0
        %731 = vmatprep.subr.bf16.mxu0 0
        %732 = vmatpush1.bf16.msra.mxu0 0
        %733 = vmatprep.subr.bf16.mxu0 0
        %734 = vmatpush1.bf16.msra.mxu0 0
        %735 = vmatprep.mubr.bf16.mxu0 0
        %736 = vmatmul.mubr.bf16.gmra.mrb[0].mxu0 %v698
        %v737 = vpop.f32.mrb[0].mxu0
        %v738 = vadd.f32 0.0, %v737
        %v739 = vpop.f32.mrb[0].mxu0
        %v740 = vpop.f32.mrb[0].mxu0
        %v741 = vpop.f32.mrb[0].mxu0
        %742 = vdwg.mxu0
        %v744 = vsel %vm294, %v603, 0
        %v747 = vsel %vm607, %v293, 0
        %749 = vmatprep.subr.bf16.mxu0 0
        %750 = vmatpush1.bf16.msra.mxu0 %v747
        %751 = vmatprep.subr.bf16.mxu0 0
        %752 = vmatpush1.bf16.msra.mxu0 0
        %753 = vmatprep.subr.bf16.mxu0 0
        %754 = vmatpush1.bf16.msra.mxu0 0
        %755 = vmatprep.subr.bf16.mxu0 0
        %756 = vmatpush1.bf16.msra.mxu0 0
        %757 = vmatprep.subr.bf16.mxu0 0
        %758 = vmatpush1.bf16.msra.mxu0 0
        %759 = vmatprep.subr.bf16.mxu0 0
        %760 = vmatpush1.bf16.msra.mxu0 0
        %761 = vmatprep.subr.bf16.mxu0 0
        %762 = vmatpush1.bf16.msra.mxu0 0
        %763 = vmatprep.subr.bf16.mxu0 0
        %764 = vmatpush1.bf16.msra.mxu0 0
        %765 = vmatprep.subr.bf16.mxu0 0
        %766 = vmatpush1.bf16.msra.mxu0 0
        %767 = vmatprep.subr.bf16.mxu0 0
        %768 = vmatpush1.bf16.msra.mxu0 0
        %769 = vmatprep.subr.bf16.mxu0 0
        %770 = vmatpush1.bf16.msra.mxu0 0
        %771 = vmatprep.subr.bf16.mxu0 0
        %772 = vmatpush1.bf16.msra.mxu0 0
        %773 = vmatprep.subr.bf16.mxu0 0
        %774 = vmatpush1.bf16.msra.mxu0 0
        %775 = vmatprep.subr.bf16.mxu0 0
        %776 = vmatpush1.bf16.msra.mxu0 0
        %777 = vmatprep.subr.bf16.mxu0 0
        %778 = vmatpush1.bf16.msra.mxu0 0
        %779 = vmatprep.subr.bf16.mxu0 0
        %780 = vmatpush1.bf16.msra.mxu0 0
        %781 = vmatprep.mubr.bf16.mxu0 0
        %782 = vmatmul.mubr.bf16.gmra.mrb[0].mxu0 %v744
        %v783 = vpop.f32.mrb[0].mxu0
        %v784 = vadd.f32 0.0, %v783
        %v785 = vpop.f32.mrb[0].mxu0
        %v786 = vpop.f32.mrb[0].mxu0
        %v787 = vpop.f32.mrb[0].mxu0
        %788 = vdwg.mxu0
        %v789 = vadd.f32 %v596, %v646
        %v790 = vadd.f32 %v597, %v692
        %v791 = vadd.f32 %v598, %v738
        %v792 = vadd.f32 %v599, %v784
        %793 = vst.msk [vmem:[#allocation4] sm:$0xff] %vm294, %v789
        %794 = vst.msk [vmem:[#allocation4 + $0x8] sm:$0xff] %vm294, %v790
        %795 = vst.msk [vmem:[#allocation4 + $0x10] sm:$0xff] %vm294, %v791
        %796 = vst.msk [vmem:[#allocation4 + $0x18] sm:$0xff] %vm294, %v792
        %797 = vst.msk [vmem:[#allocation2] sm:$0xff] %vm567, %v495
        %798 = vst.msk [vmem:[#allocation2 + $0x8] sm:$0xff] %vm567, %v496
        %799 = vst.msk [vmem:[#allocation2 + $0x10] sm:$0xff] %vm567, %v497
        %800 = vst.msk [vmem:[#allocation2 + $0x18] sm:$0xff] %vm567, %v498
        // Predicated region
        $region37: #{multi_attention.3} parent=31 // pred_check
          %p801 = pneg %p264
        $region38: #{multi_attention.3} parent=31 // pred_check_branch
          %803 = sbr.rel (%p801) target = $region40
        $region39: #{multi_attention.3} parent=31 // pred_region
          %v804 = vld [vmem:[#allocation3] sm:$0xff]
          %v805 = vld [vmem:[#allocation3 + $0x8] sm:$0xff]
          %v806 = vld [vmem:[#allocation3 + $0x10] sm:$0xff]
          %v807 = vld [vmem:[#allocation3 + $0x18] sm:$0xff]
          %v808 = vrcp.pop %v804
          %v809 = vrcp.pop %v805
          %v810 = vrcp.pop %v806
          %v811 = vrcp.pop %v807
          %v812 = vld [vmem:[#allocation4] sm:$0xff]
          %v813 = vld [vmem:[#allocation4 + $0x8] sm:$0xff]
          %v814 = vld [vmem:[#allocation4 + $0x10] sm:$0xff]
          %v815 = vld [vmem:[#allocation4 + $0x18] sm:$0xff]
          %817 = vset.pattern.permute.xlu0 0
          %818 = vperm.xlu0 %817, %v808
          %v819 = vpop.permute.xlu0 %818
          %822 = vset.pattern.permute.xlu0 0
          %823 = vperm.xlu0 %822, %v809
          %v824 = vpop.permute.xlu0 %823
          %827 = vset.pattern.permute.xlu0 0
          %828 = vperm.xlu0 %827, %v810
          %v829 = vpop.permute.xlu0 %828
          %832 = vset.pattern.permute.xlu0 0
          %833 = vperm.xlu0 %832, %v811
          %v834 = vpop.permute.xlu0 %833
          %v836 = vmul.f32 %v812, %v819
          %v837 = vmul.f32 %v813, %v824
          %v838 = vmul.f32 %v814, %v829
          %v839 = vmul.f32 %v815, %v834
          %840 = vst.msk [vmem:[%s238] sm:$0xff] %vm294, %v836
          %842 = vrot.lane.b32.xlu0 %v837, 8
          %v843 = vpop.permute.xlu0 %842
          %vm845 = vcmask 130112
          %846 = vst.msk [vmem:[%s238] sm:$0xff] %vm845, %v843
          %848 = vrot.lane.b32.xlu0 %v838, 16
          %v849 = vpop.permute.xlu0 %848
          %vm851 = vcmask 195712
          %852 = vst.msk [vmem:[%s238] sm:$0xff] %vm851, %v849
          %854 = vrot.lane.b32.xlu0 %v839, 24
          %v855 = vpop.permute.xlu0 %854
          %vm857 = vcmask 261312
          %858 = vst.msk [vmem:[%s238] sm:$0xff] %vm857, %v855
        $region40: #{multi_attention.3} parent=31 // pred_fallthru
          _
        %s859 = sand.u32 %s130, 1
        %s860 = scalar_lea.sflag [#allocation6], %s859
        %s861 = sand.u32 %s130, 1
        %s862 = smul.addr %s861, 8
        %s863 = scalar_lea.vmem [#allocation5], %s862
        // Predicated region
        $region41: #{multi_attention.3} parent=31 // pred_check
          %p864 = pneg %p140
        $region42: #{multi_attention.3} parent=31 // pred_check_branch
          %866 = sbr.rel (%p864) target = $region44
        $region43: #{multi_attention.3} parent=31 // pred_region
          %s868 = ssub.s32 128, 128
          %869 = vsyncadd %s860, %s868
          %s870 = sadd.s32 %s23, %s22
          %s871 = smul.addr %s870, 128
          %s872 = scalar_lea.hbm %s3, %s871
          %s874 = sshll.u32 %s863, 4
          %s875 = int_to_ptr.vmem [resolvable:$true] %s874
          %877 = dma.vmem_to_hbm [thread:$0]  %s875, 128, %s872, %s860
        $region44: #{multi_attention.3} parent=31 // pred_fallthru
          _
      $region32: #{multi_attention.3} parent=5 // pred_fallthru
        _
      %p878 = scmp.le.s32.totalorder 2, %s12
      // Predicated region
      $region45: #{multi_attention.3} parent=5 // pred_check
        %p879 = pneg %p878
      $region46: #{multi_attention.3} parent=5 // pred_check_branch
        %881 = sbr.rel (%p879) target = $region48
      $region47: #{multi_attention.3} parent=5 // pred_region
        %s882 = ssub.s32 %s12, 2
        // Predicated region
        $region49: #{multi_attention.3} parent=47 // pred_check
          %p883 = pneg %p146
        $region50: #{multi_attention.3} parent=47 // pred_check_branch
          %885 = sbr.rel (%p883) target = $region52
        $region51: #{multi_attention.3} parent=47 // pred_region
          %s886 = sand.u32 %s131, 1
          %s887 = scalar_lea.sflag [#allocation6], %s886
          %s888 = sand.u32 %s131, 1
          %s889 = smul.addr %s888, 8
          %s890 = scalar_lea.vmem [#allocation5], %s889
          %891 = dma.done %s887, 128
        $region52: #{multi_attention.3} parent=47 // pred_fallthru
          _
      $region48: #{multi_attention.3} parent=5 // pred_fallthru
        _
    $region6: #{multi_attention.3} parent=1 // loop_footer
      %s16 = sadd.s32 1, %s12
    $region7: #{multi_attention.3} parent=1 // loop_footer_branch
      %11 = sbr.rel target = $region3
    $region8: #{multi_attention.3} parent=1 // loop_exit
      _
    %892 = vsyncpa [#allocation6], 1
    %s893 = scalar_lea.sflag [#allocation6], 1
    %894 = vsyncpa %s893, 1

</llo_original>
